<compile_context>
chip_gen: v6e
topology: v6e:2x2x1
jax: 0.10.0
libtpu: 0.0.40
codegen_flags: <defaults>
</compile_context>

<pallas_src>
import functools
import math

import jax
import jax.numpy as jnp
from jax import lax
from jax.experimental import pallas as pl
from jax.experimental.pallas import tpu as pltpu


def _chip_defaults():
    """(tq_cap, vmem_limit_bytes) tuned per TPU generation."""
    kind = ""
    try:
        kind = jax.devices()[0].device_kind.lower()
    except Exception:  # pragma: no cover - defensive
        pass
    try:
        vmem_bytes = int(pltpu.get_tpu_info().vmem_capacity_bytes)
    except Exception:  # pragma: no cover - defensive
        vmem_bytes = (64 << 20) if "v7" in kind else (128 << 20)
    # Leave ~25% headroom for compiler-internal scratch / semaphores.
    vmem_limit = min(vmem_bytes * 3 // 4, 112 << 20)
    if "v7" in kind:
        tq_cap = 256   # fit 64 MiB/TC VMEM; N=256 still fills the 256-wide MXU
    elif "v5" in kind:
        tq_cap = 256   # 128-wide MXUs; smaller tiles ease VMEM/vreg pressure
    else:
        tq_cap = 512   # v6e: 128 MiB VMEM, 256-wide MXU output
    return tq_cap, vmem_limit


def _pick_tq(s_len: int, cap: int) -> int:
    """Largest query tile <= cap that divides S and is a multiple of 128."""
    if s_len <= cap:
        return s_len
    best = None
    t = 128
    while t <= cap:
        if s_len % t == 0:
            best = t
        t += 128
    if best is None:
        # No lane-aligned divisor.  Only fall back to a single full-S tile
        # when the (S, S) score matrix is still small; otherwise fail loudly
        # instead of silently blowing VMEM (review correctness concern).
        if s_len <= 2048:
            return s_len
        raise ValueError(
            f"h*w={s_len} has no query-tile divisor that is a multiple of 128 "
            f"and <= {cap}; pad the spatial dims or pass tq explicitly.")
    return best


def _make_kernel(c, s_len, tq, compute_dtype, approx_recip):
    def kernel(xf_ref, wq_ref, wk_ref, wv_ref, wo_ref, bq_ref, bkvo_ref,
               o_ref, q_s, k_s, v_s):
        qi = pl.program_id(1)

        # Per-batch Q/K/V projection: computed once (qi == 0) and cached in
        # VMEM scratch.  Split into three (c,c)@(c,S) matmuls so no f32
        # (3c, S) intermediate is ever materialized; Q is produced directly
        # in the (S, c) layout by the MXU contraction.
        # NOTE: this caching is only correct because the q-tile grid axis is
        # innermost and marked "arbitrary" -- do not reorder / parallelize it.
        @pl.when(qi == 0)
        def _():
            x_all = xf_ref[0].astype(compute_dtype)                   # (c, S)
            # Q = x^T @ Wq^T  (scale already folded into Wq / bq).
            q = lax.dot_general(x_all, wq_ref[...],
                                (((0,), (1,)), ((), ())),
                                preferred_element_type=jnp.float32)    # (S, c)
            q_s[...] = (q + bq_ref[...]).astype(compute_dtype)         # (1,c) bcast
            k = jnp.dot(wk_ref[...], x_all,
                        preferred_element_type=jnp.float32)            # (c, S)
            k_s[...] = (k + bkvo_ref[:, 0:1]).astype(compute_dtype)
            v = jnp.dot(wv_ref[...], x_all,
                        preferred_element_type=jnp.float32)            # (c, S)
            v_s[...] = (v + bkvo_ref[:, 1:2]).astype(compute_dtype)

        row0 = pl.multiple_of(qi * tq, tq)
        q = q_s[pl.ds(row0, tq), :]                                    # (tq, c)

        # scores: (tq, c) @ (c, S) -> (tq, S), f32 accumulation, scale folded.
        s = jnp.dot(q, k_s[...], preferred_element_type=jnp.float32)

        # softmax over keys, numerically stable, all in f32.
        s = s - jnp.max(s, axis=-1, keepdims=True)
        p = jnp.exp(s)
        denom = jnp.sum(p, axis=-1, keepdims=True)
        if approx_recip:
            # EUP approximate reciprocal: rows sum to ~1 (within bf16 path
            # tolerance); use the exact divide in the f32 path.
            p = p * pl.reciprocal(denom, approx=True)
        else:
            p = p / denom

        # attention output kept in the (c, tq) layout: V @ P^T (NT dot).
        o = lax.dot_general(v_s[...], p.astype(compute_dtype),
                            (((1,), (1,)), ((), ())),
                            preferred_element_type=jnp.float32)        # (c, tq)

        # out projection (weights on the left keeps PyTorch layout) + bias.
        out = jnp.dot(wo_ref[...], o.astype(compute_dtype),
                      preferred_element_type=jnp.float32)              # (c, tq)
        out = out + bkvo_ref[:, 2:3]                                   # b_out

        # residual add in f32, read as a slice of the resident (c, S) block
        # (no second HBM stream for the residual).
        out = out + xf_ref[0, :, pl.ds(row0, tq)].astype(jnp.float32)
        o_ref[0] = out.astype(o_ref.dtype)

    return kernel


@functools.partial(
    jax.jit,
    static_argnames=("tq", "compute_dtype", "vmem_limit_bytes",
                     "single_buffer_x"))
def _attention_block(x_nchw, params, *, tq, compute_dtype, vmem_limit_bytes,
                     single_buffer_x):
    in_w, in_b, out_w, out_b = params
    m, c, h, w = x_nchw.shape
    s_len = h * w
    n_q = s_len // tq

    # Fold the 1/sqrt(c) attention scale into the Q projection weight / bias.
    scale = 1.0 / math.sqrt(c)
    w_q = (in_w[:c] * scale).astype(compute_dtype)                    # (c, c)
    w_k = in_w[c:2 * c].astype(compute_dtype)                         # (c, c)
    w_v = in_w[2 * c:].astype(compute_dtype)                          # (c, c)
    w_o = out_w.astype(compute_dtype)                                 # (c, c)
    b_q = (in_b[:c] * scale).reshape(1, c).astype(jnp.float32)        # lane-dense
    b_kvo = jnp.stack([in_b[c:2 * c], in_b[2 * c:], out_b],
                      axis=1).astype(jnp.float32)                     # (c, 3)

    # NCHW -> (m, c, S): a free reshape, no transpose / extra HBM pass.
    x_seq = x_nchw.reshape(m, c, s_len)

    kernel = _make_kernel(c, s_len, tq, compute_dtype,
                          approx_recip=(compute_dtype != jnp.float32))

    # The full-activation block only changes with the batch index; on
    # VMEM-tight chips (v7x) drop it to a single pipeline buffer.
    if single_buffer_x:
        x_spec = pl.BlockSpec((1, c, s_len), lambda b, i: (b, 0, 0),
                              pipeline_mode=pl.Buffered(1))
    else:
        x_spec = pl.BlockSpec((1, c, s_len), lambda b, i: (b, 0, 0))

    flops = 2 * m * (4 * s_len * c * c + 2 * s_len * s_len * c)
    bytes_accessed = (2 * m * c * s_len * x_seq.dtype.itemsize        # x + out
                      + 4 * c * c * jnp.dtype(compute_dtype).itemsize # weights
                      + 4 * c * 4)                                    # biases

    out_seq = pl.pallas_call(
        kernel,
        out_shape=jax.ShapeDtypeStruct((m, c, s_len), x_nchw.dtype),
        grid_spec=pltpu.PrefetchScalarGridSpec(
            num_scalar_prefetch=0,
            grid=(m, n_q),
            in_specs=[
                x_spec,                                             # x (c, S)
                pl.BlockSpec((c, c), lambda b, i: (0, 0)),          # W_q (scaled)
                pl.BlockSpec((c, c), lambda b, i: (0, 0)),          # W_k
                pl.BlockSpec((c, c), lambda b, i: (0, 0)),          # W_v
                pl.BlockSpec((c, c), lambda b, i: (0, 0)),          # W_out
                pl.BlockSpec((1, c), lambda b, i: (0, 0)),          # b_q (scaled)
                pl.BlockSpec((c, 3), lambda b, i: (0, 0)),          # [b_k|b_v|b_o]
            ],
            out_specs=pl.BlockSpec((1, c, tq), lambda b, i: (b, 0, i)),
            scratch_shapes=[
                pltpu.VMEM((s_len, c), compute_dtype),   # Q (already (S, c))
                pltpu.VMEM((c, s_len), compute_dtype),   # K
                pltpu.VMEM((c, s_len), compute_dtype),   # V
            ],
        ),
        compiler_params=pltpu.CompilerParams(
            # q-tile axis must stay "arbitrary": the QKV scratch cache is
            # filled at q_tile == 0 and reused by later tiles of that batch.
            dimension_semantics=("parallel", "arbitrary"),
            vmem_limit_bytes=int(vmem_limit_bytes)),
        cost_estimate=pl.CostEstimate(flops=int(flops),
                                      transcendentals=int(m * s_len * s_len),
                                      bytes_accessed=int(bytes_accessed)),
    )(x_seq, w_q, w_k, w_v, w_o, b_q, b_kvo)

    # (m, c, S) -> NCHW: free reshape; residual already added in the kernel.
    return out_seq.reshape(m, c, h, w)


def attention_block(x_nchw, params, *, tq=None, compute_dtype=jnp.bfloat16):
    m, c, h, w = x_nchw.shape
    s_len = h * w
    tq_cap, vmem_limit = _chip_defaults()
    if tq is None:
        tq = _pick_tq(s_len, tq_cap)
    assert s_len % tq == 0, "query tile must divide h*w"
    assert tq == s_len or tq % 128 == 0, "query tile must be lane-aligned"
    # Single-buffer the full activation block if double-buffering it would
    # consume more than a quarter of the VMEM budget (v7x at SD-scale shapes).
    single_buffer_x = (2 * c * s_len * x_nchw.dtype.itemsize) > (vmem_limit // 4)
    return _attention_block(x_nchw, params, tq=int(tq),
                            compute_dtype=compute_dtype,
                            vmem_limit_bytes=int(vmem_limit),
                            single_buffer_x=bool(single_buffer_x))


def make_params(key, channels):
    """Synthetic params with the same shapes/layout as the PyTorch module."""
    c = channels
    ks = jax.random.split(key, 4)
    # SelfAttention.in_proj = nn.Linear(c, 3c): weight (3c, c), bias (3c,)
    in_w = jax.random.normal(ks[0], (3 * c, c), jnp.float32) * (1.0 / math.sqrt(c))
    in_b = jax.random.normal(ks[1], (3 * c,), jnp.float32) * 0.02
    # SelfAttention.out_proj = nn.Linear(c, c): weight (c, c), bias (c,)
    out_w = jax.random.normal(ks[2], (c, c), jnp.float32) * (1.0 / math.sqrt(c))
    out_b = jax.random.normal(ks[3], (c,), jnp.float32) * 0.02
    # NOTE: nn.GroupNorm(32, c) is constructed by the module but never applied
    # in forward(), so its parameters are intentionally not materialized.
    return (in_w, in_b, out_w, out_b)


def attention_block_ref(x_nchw, params):
    """Pure-JAX reference mirroring the PyTorch forward exactly."""
    in_w, in_b, out_w, out_b = params
    m, c, h, w = x_nchw.shape
    residual = x_nchw
    x = jnp.transpose(x_nchw.reshape(m, c, h * w), (0, 2, 1))       # (m, S, c)
    qkv = x @ in_w.T + in_b                                          # (m, S, 3c)
    q, k, v = jnp.split(qkv, 3, axis=-1)
    s = (q @ jnp.swapaxes(k, -1, -2)) / math.sqrt(c)
    p = jax.nn.softmax(s, axis=-1)
    o = (p @ v) @ out_w.T + out_b
    o = jnp.transpose(o, (0, 2, 1)).reshape(m, c, h, w)
    return o + residual


if __name__ == "__main__":
    # channels must be a multiple of 32 (GroupNorm(32, channels) constraint);
    # 128 keeps the lane dimension dense; 16x16 spatial -> S = 256.
    batch, channels, height, width = 2, 128, 16, 16

    key = jax.random.PRNGKey(0)
    kx, kp = jax.random.split(key)
    x = jax.random.normal(kx, (batch, channels, height, width), jnp.float32)
    params = make_params(kp, channels)

    ref = jax.block_until_ready(attention_block_ref(x, params))

    # Exact-precision path with tq=128: validates the kernel math tightly and
    # exercises the multi-tile (scratch-reuse) path (two q-tiles per batch).
    out_f32 = jax.block_until_ready(
        attention_block(x, params, tq=128, compute_dtype=jnp.float32))
    assert out_f32.shape == x.shape and out_f32.dtype == x.dtype
    assert jnp.allclose(out_f32, ref, atol=1e-4, rtol=1e-4), "f32 kernel mismatch"

    # Fast path: chip-default tile, bf16 MXU matmuls with f32 accumulation
    # and f32 softmax.
    out_bf16 = jax.block_until_ready(
        attention_block(x, params, compute_dtype=jnp.bfloat16))
    assert out_bf16.shape == x.shape and out_bf16.dtype == x.dtype
    assert jnp.allclose(out_bf16, ref, atol=3e-2, rtol=3e-2), "bf16 kernel mismatch"

    print("KERNEL_OK")
</pallas_src>

<mosaic_0001>
module attributes {stable_mosaic.version = 11 : i64} {
  func.func @kernel(%arg0: i32, %arg1: i32, %arg2: memref<1x128x256xf32, #tpu.memory_space<vmem>>, %arg3: memref<128x128xf32, #tpu.memory_space<vmem>>, %arg4: memref<128x128xf32, #tpu.memory_space<vmem>>, %arg5: memref<128x128xf32, #tpu.memory_space<vmem>>, %arg6: memref<128x128xf32, #tpu.memory_space<vmem>>, %arg7: memref<1x128xf32, #tpu.memory_space<vmem>>, %arg8: memref<128x3xf32, #tpu.memory_space<vmem>>, %arg9: memref<1x128x128xf32, #tpu.memory_space<vmem>>, %arg10: memref<256x128xf32, #tpu.memory_space<vmem>>, %arg11: memref<128x256xf32, #tpu.memory_space<vmem>>, %arg12: memref<128x256xf32, #tpu.memory_space<vmem>>) attributes {dimension_semantics = [#tpu.dimension_semantics<parallel>, #tpu.dimension_semantics<arbitrary>], iteration_bounds = array<i64: 2, 2>, scalar_prefetch = 0 : i64, scratch_operands = 3 : i64, tpu.core_type = #tpu.core_type<tc>, window_params = [{transform_indices = @transform_0, window_bounds = array<i64: 1, 128, 256>}, {pipeline_mode = #tpu.pipeline_mode<synchronous>, transform_indices = @transform_1, window_bounds = array<i64: 128, 128>}, {pipeline_mode = #tpu.pipeline_mode<synchronous>, transform_indices = @transform_2, window_bounds = array<i64: 128, 128>}, {pipeline_mode = #tpu.pipeline_mode<synchronous>, transform_indices = @transform_3, window_bounds = array<i64: 128, 128>}, {pipeline_mode = #tpu.pipeline_mode<synchronous>, transform_indices = @transform_4, window_bounds = array<i64: 128, 128>}, {pipeline_mode = #tpu.pipeline_mode<synchronous>, transform_indices = @transform_5, window_bounds = array<i64: 1, 128>}, {pipeline_mode = #tpu.pipeline_mode<synchronous>, transform_indices = @transform_6, window_bounds = array<i64: 128, 3>}, {transform_indices = @transform_7, window_bounds = array<i64: 1, 128, 128>}]} {
    %c0_i32 = arith.constant 0 : i32
    %0 = arith.cmpi eq, %arg1, %c0_i32 : i32
    %1 = arith.extui %0 : i1 to i32
    %c0_i32_0 = arith.constant 0 : i32
    %2 = arith.cmpi ne, %1, %c0_i32_0 : i32
    scf.if %2 {
      %c0_17 = arith.constant 0 : index
      %c0_18 = arith.constant 0 : index
      %c0_19 = arith.constant 0 : index
      %32 = vector.load %arg2[%c0_17, %c0_18, %c0_19] : memref<1x128x256xf32, #tpu.memory_space<vmem>>, vector<1x128x256xf32>
      %33 = vector.shape_cast %32 : vector<1x128x256xf32> to vector<128x256xf32>
      %c0_20 = arith.constant 0 : index
      %c0_21 = arith.constant 0 : index
      %34 = vector.load %arg3[%c0_20, %c0_21] : memref<128x128xf32, #tpu.memory_space<vmem>>, vector<128x128xf32>
      %cst_22 = arith.constant dense<0.000000e+00> : vector<256x128xf32>
      %35 = tpu.matmul %33, %34, %cst_22 {dimension_numbers = #tpu.dot_dimension_numbers<[0], [1], [1], [0], [0, 1, 1, 0], [], []>} : vector<128x256xf32>, vector<128x128xf32>, vector<256x128xf32> -> vector<256x128xf32>
      %c0_23 = arith.constant 0 : index
      %c0_24 = arith.constant 0 : index
      %36 = vector.load %arg7[%c0_23, %c0_24] : memref<1x128xf32, #tpu.memory_space<vmem>>, vector<1x128xf32>
      %37 = vector.broadcast %36 : vector<1x128xf32> to vector<256x128xf32>
      %38 = arith.addf %35, %37 : vector<256x128xf32>
      %c0_25 = arith.constant 0 : index
      %c0_26 = arith.constant 0 : index
      %39 = vector.load %arg10[%c0_25, %c0_26] : memref<256x128xf32, #tpu.memory_space<vmem>>, vector<256x128xf32>
      tpu.vector_store %arg10[%c0_25, %c0_26], %38 {strides = array<i32>} : memref<256x128xf32, #tpu.memory_space<vmem>>, vector<256x128xf32>,
      %c0_27 = arith.constant 0 : index
      %c0_28 = arith.constant 0 : index
      %40 = vector.load %arg4[%c0_27, %c0_28] : memref<128x128xf32, #tpu.memory_space<vmem>>, vector<128x128xf32>
      %cst_29 = arith.constant dense<0.000000e+00> : vector<128x256xf32>
      %41 = tpu.matmul %40, %33, %cst_29 {dimension_numbers = #tpu.dot_dimension_numbers<[1], [0], [0], [1], [0, 0, 1, 1], [], []>} : vector<128x128xf32>, vector<128x256xf32>, vector<128x256xf32> -> vector<128x256xf32>
      %c0_30 = arith.constant 0 : index
      %c0_31 = arith.constant 0 : index
      %42 = vector.load %arg8[%c0_30, %c0_31] : memref<128x3xf32, #tpu.memory_space<vmem>>, vector<128x1xf32>
      %43 = vector.broadcast %42 : vector<128x1xf32> to vector<128x256xf32>
      %44 = arith.addf %41, %43 : vector<128x256xf32>
      %c0_32 = arith.constant 0 : index
      %c0_33 = arith.constant 0 : index
      %45 = vector.load %arg11[%c0_32, %c0_33] : memref<128x256xf32, #tpu.memory_space<vmem>>, vector<128x256xf32>
      tpu.vector_store %arg11[%c0_32, %c0_33], %44 {strides = array<i32>} : memref<128x256xf32, #tpu.memory_space<vmem>>, vector<128x256xf32>,
      %c0_34 = arith.constant 0 : index
      %c0_35 = arith.constant 0 : index
      %46 = vector.load %arg5[%c0_34, %c0_35] : memref<128x128xf32, #tpu.memory_space<vmem>>, vector<128x128xf32>
      %cst_36 = arith.constant dense<0.000000e+00> : vector<128x256xf32>
      %47 = tpu.matmul %46, %33, %cst_36 {dimension_numbers = #tpu.dot_dimension_numbers<[1], [0], [0], [1], [0, 0, 1, 1], [], []>} : vector<128x128xf32>, vector<128x256xf32>, vector<128x256xf32> -> vector<128x256xf32>
      %c0_37 = arith.constant 0 : index
      %c1 = arith.constant 1 : index
      %48 = vector.load %arg8[%c0_37, %c1] : memref<128x3xf32, #tpu.memory_space<vmem>>, vector<128x1xf32>
      %49 = vector.broadcast %48 : vector<128x1xf32> to vector<128x256xf32>
      %50 = arith.addf %47, %49 : vector<128x256xf32>
      %c0_38 = arith.constant 0 : index
      %c0_39 = arith.constant 0 : index
      %51 = vector.load %arg12[%c0_38, %c0_39] : memref<128x256xf32, #tpu.memory_space<vmem>>, vector<128x256xf32>
      tpu.vector_store %arg12[%c0_38, %c0_39], %50 {strides = array<i32>} : memref<128x256xf32, #tpu.memory_space<vmem>>, vector<128x256xf32>,
    } else {
    }
    %c128_i32 = arith.constant 128 : i32
    %3 = arith.muli %arg1, %c128_i32 : i32
    %4 = tpu.assume_multiple %3, 128 : i32
    %5 = arith.index_cast %4 : i32 to index
    %c0 = arith.constant 0 : index
    %6 = vector.load %arg10[%5, %c0] : memref<256x128xf32, #tpu.memory_space<vmem>>, vector<128x128xf32>
    %c0_1 = arith.constant 0 : index
    %c0_2 = arith.constant 0 : index
    %7 = vector.load %arg11[%c0_1, %c0_2] : memref<128x256xf32, #tpu.memory_space<vmem>>, vector<128x256xf32>
    %cst = arith.constant dense<0.000000e+00> : vector<128x256xf32>
    %8 = tpu.matmul %6, %7, %cst {dimension_numbers = #tpu.dot_dimension_numbers<[1], [0], [0], [1], [0, 0, 1, 1], [], []>} : vector<128x128xf32>, vector<128x256xf32>, vector<128x256xf32> -> vector<128x256xf32>
    %cst_3 = arith.constant dense<0xFF800000> : vector<128xf32>
    %9 = vector.multi_reduction <maximumf>, %8, %cst_3 [1] : vector<128x256xf32> to vector<128xf32>
    %10 = vector.shape_cast %9 : vector<128xf32> to vector<128x1xf32>
    %11 = vector.broadcast %10 : vector<128x1xf32> to vector<128x256xf32>
    %12 = arith.subf %8, %11 : vector<128x256xf32>
    %13 = math.exp %12 : vector<128x256xf32>
    %cst_4 = arith.constant dense<0.000000e+00> : vector<128xf32>
    %14 = vector.multi_reduction <add>, %13, %cst_4 [1] : vector<128x256xf32> to vector<128xf32>
    %15 = vector.shape_cast %14 : vector<128xf32> to vector<128x1xf32>
    %16 = vector.broadcast %15 : vector<128x1xf32> to vector<128x256xf32>
    %17 = arith.divf %13, %16 : vector<128x256xf32>
    %c0_5 = arith.constant 0 : index
    %c0_6 = arith.constant 0 : index
    %18 = vector.load %arg12[%c0_5, %c0_6] : memref<128x256xf32, #tpu.memory_space<vmem>>, vector<128x256xf32>
    %cst_7 = arith.constant dense<0.000000e+00> : vector<128x128xf32>
    %19 = tpu.matmul %18, %17, %cst_7 {dimension_numbers = #tpu.dot_dimension_numbers<[1], [1], [0], [0], [0, 0, 1, 0], [], []>} : vector<128x256xf32>, vector<128x256xf32>, vector<128x128xf32> -> vector<128x128xf32>
    %c0_8 = arith.constant 0 : index
    %c0_9 = arith.constant 0 : index
    %20 = vector.load %arg6[%c0_8, %c0_9] : memref<128x128xf32, #tpu.memory_space<vmem>>, vector<128x128xf32>
    %cst_10 = arith.constant dense<0.000000e+00> : vector<128x128xf32>
    %21 = tpu.matmul %20, %19, %cst_10 {dimension_numbers = #tpu.dot_dimension_numbers<[1], [0], [0], [1], [0, 0, 1, 1], [], []>} : vector<128x128xf32>, vector<128x128xf32>, vector<128x128xf32> -> vector<128x128xf32>
    %c0_11 = arith.constant 0 : index
    %c2 = arith.constant 2 : index
    %22 = vector.load %arg8[%c0_11, %c2] : memref<128x3xf32, #tpu.memory_space<vmem>>, vector<128x1xf32>
    %23 = vector.broadcast %22 : vector<128x1xf32> to vector<128x128xf32>
    %24 = arith.addf %21, %23 : vector<128x128xf32>
    %c0_12 = arith.constant 0 : index
    %c0_13 = arith.constant 0 : index
    %25 = arith.index_cast %4 : i32 to index
    %26 = vector.load %arg2[%c0_12, %c0_13, %25] : memref<1x128x256xf32, #tpu.memory_space<vmem>>, vector<1x128x128xf32>
    %27 = vector.shape_cast %26 : vector<1x128x128xf32> to vector<128x128xf32>
    %28 = arith.addf %24, %27 : vector<128x128xf32>
    %c0_14 = arith.constant 0 : index
    %c0_15 = arith.constant 0 : index
    %c0_16 = arith.constant 0 : index
    %29 = vector.load %arg9[%c0_14, %c0_15, %c0_16] : memref<1x128x128xf32, #tpu.memory_space<vmem>>, vector<1x128x128xf32>
    %30 = vector.shape_cast %29 : vector<1x128x128xf32> to vector<128x128xf32>
    %31 = vector.shape_cast %28 : vector<128x128xf32> to vector<1x128x128xf32>
    tpu.vector_store %arg9[%c0_14, %c0_15, %c0_16], %31 {strides = array<i32>} : memref<1x128x128xf32, #tpu.memory_space<vmem>>, vector<1x128x128xf32>,
    return
  }
  func.func @transform_0(%arg0: i32, %arg1: i32) -> (i32, i32, i32) {
    %c0_i32 = arith.constant 0 : i32
    %c0_i32_0 = arith.constant 0 : i32
    %c0_i32_1 = arith.constant 0 : i32
    return %arg0, %c0_i32, %c0_i32_0 : i32, i32, i32
  }
  func.func @transform_1(%arg0: i32, %arg1: i32) -> (i32, i32) {
    %c0_i32 = arith.constant 0 : i32
    %c0_i32_0 = arith.constant 0 : i32
    %c0_i32_1 = arith.constant 0 : i32
    return %c0_i32, %c0_i32_0 : i32, i32
  }
  func.func @transform_2(%arg0: i32, %arg1: i32) -> (i32, i32) {
    %c0_i32 = arith.constant 0 : i32
    %c0_i32_0 = arith.constant 0 : i32
    %c0_i32_1 = arith.constant 0 : i32
    return %c0_i32, %c0_i32_0 : i32, i32
  }
  func.func @transform_3(%arg0: i32, %arg1: i32) -> (i32, i32) {
    %c0_i32 = arith.constant 0 : i32
    %c0_i32_0 = arith.constant 0 : i32
    %c0_i32_1 = arith.constant 0 : i32
    return %c0_i32, %c0_i32_0 : i32, i32
  }
  func.func @transform_4(%arg0: i32, %arg1: i32) -> (i32, i32) {
    %c0_i32 = arith.constant 0 : i32
    %c0_i32_0 = arith.constant 0 : i32
    %c0_i32_1 = arith.constant 0 : i32
    return %c0_i32, %c0_i32_0 : i32, i32
  }
  func.func @transform_5(%arg0: i32, %arg1: i32) -> (i32, i32) {
    %c0_i32 = arith.constant 0 : i32
    %c0_i32_0 = arith.constant 0 : i32
    %c0_i32_1 = arith.constant 0 : i32
    return %c0_i32, %c0_i32_0 : i32, i32
  }
  func.func @transform_6(%arg0: i32, %arg1: i32) -> (i32, i32) {
    %c0_i32 = arith.constant 0 : i32
    %c0_i32_0 = arith.constant 0 : i32
    %c0_i32_1 = arith.constant 0 : i32
    return %c0_i32, %c0_i32_0 : i32, i32
  }
  func.func @transform_7(%arg0: i32, %arg1: i32) -> (i32, i32, i32) {
    %c0_i32 = arith.constant 0 : i32
    %c0_i32_0 = arith.constant 0 : i32
    return %arg0, %c0_i32, %arg1 : i32, i32, i32
  }
}

</mosaic_0001>

<llo_original>
// kernel: _attention_block.1
$region0: #{_attention_block.1}
  #allocation0 [shape = 'u32[]', space=smem, size = 0x4, offset = 0x4, fixed_abs, tag = 'smem constant byte address 0x4 - core index']
  #allocation1 [shape = 'u32[144,128]{1,0:T(1,128)}', space=vmem, size = 0x12000, scoped, tag = 'internal scratch']
  #allocation2 [shape = 'f32[256,128]{1,0:T(8,128)}', space=vmem, size = 0x20000, scoped, tag = 'scratch operand']
  #allocation3 [shape = 'f32[128,256]{1,0:T(8,128)}', space=vmem, size = 0x20000, scoped, tag = 'scratch operand']
  #allocation4 [shape = 'f32[128,256]{1,0:T(8,128)}', space=vmem, size = 0x20000, scoped, tag = 'scratch operand']
  %s0 = inlined_call_operand.vmem [shape: f32[2,128,256], index: 0, kind: input, shape index: {}]
  %s1 = inlined_call_operand.vmem [shape: f32[128,128], index: 1, kind: input, shape index: {}]
  %s2 = inlined_call_operand.vmem [shape: f32[128,128], index: 2, kind: input, shape index: {}]
  %s3 = inlined_call_operand.vmem [shape: f32[128,128], index: 3, kind: input, shape index: {}]
  %s4 = inlined_call_operand.vmem [shape: f32[128,128], index: 4, kind: input, shape index: {}]
  %s5 = inlined_call_operand.vmem [shape: f32[1,128], index: 5, kind: input, shape index: {}]
  %s6 = inlined_call_operand.vmem [shape: f32[128,3], index: 6, kind: input, shape index: {}]
  %s7 = inlined_call_operand.vmem [shape: f32[2,128,256], index: 7, kind: output, shape index: {}]
  %s8 = sld [smem:[#allocation0]]
  $region99: #{_attention_block.1} parent=0
    _
  %s10 = ssub.s32 1, %s8
  %s11 = scalar_select 0, %s10, %s8
  $region1: #{_attention_block.1} parent=0
    #allocation5 [shape = 'u8[131072]{0}', space=vmem, size = 0x20000, scoped, tag = 'output window, operand 0']
    loop: start=0, step=1, limit=6
    $region2: #{_attention_block.1} parent=1 // loop_pre_header
      _
    $region3: #{_attention_block.1} parent=1 // loop_header
      %s13 = sphi 0, %s17
      %p14 = scmp.ge.s32.totalorder %s13, 6
      %s20 = sphi 0, %s32
      %s21 = sphi 0, %s28
      %s22 = sphi 0, %s20
      %s23 = sphi 0, %s21
      %s24 = sphi 0, %s22
      %s25 = sphi 0, %s23
      %s35 = sphi 0, %s37
      %s38 = sphi 0, %s35
      %s39 = sphi 0, %s38
      %s55 = sphi 0, %s39
      %s59 = sphi 0, %s59
      %s61 = sphi 0, %s59
      %s62 = sphi 0, %s61
      %s76 = sphi 0, %s62
      %s80 = sphi 0, %s80
      %s82 = sphi 0, %s80
      %s83 = sphi 0, %s82
      %s97 = sphi 0, %s83
      %s101 = sphi 0, %s101
      %s103 = sphi 0, %s101
      %s104 = sphi 0, %s103
      %s118 = sphi 0, %s104
      %s122 = sphi 0, %s122
      %s124 = sphi 0, %s122
      %s125 = sphi 0, %s124
      %s139 = sphi 0, %s125
      %s143 = sphi 0, %s143
      %s145 = sphi 0, %s143
      %s146 = sphi 0, %s145
      %s160 = sphi 0, %s146
      %s164 = sphi 0, %s164
      %s166 = sphi 0, %s164
      %s167 = sphi 0, %s166
      %s181 = sphi 0, %s167
      %s189 = sphi 0, %s191
      %s192 = sphi 0, %s189
      %s193 = sphi 0, %s192
      %s209 = sphi 0, %s193
    $region4: #{_attention_block.1} parent=1 // loop_header_branch
      %16 = sbr.rel (%p14) target = $region8
    $region5: #{_attention_block.1} parent=1 // loop_body
      %s18 = ssub.s32 %s13, 1
      %s19 = ssub.s32 %s13, 2
      %s26 = sadd.s32 1, %s21
      %p27 = scmp.ge.s32.totalorder %s26, 2
      %s28 = scalar_select %p27, 0, %s26
      %s29 = sadd.s32 1, %s20
      %s30 = scalar_select %p27, %s29, %s20
      %p31 = scmp.ge.s32.totalorder %s30, 2
      %s32 = scalar_select %p31, 0, %s30
      %s33 = ssub.s32 %s20, %s32
      %p34 = scmp.eq.s32.totalorder %s33, 0
      %s36 = sadd.s32 %s35, 1
      %s37 = scalar_select %p34, %s35, %s36
      %p40 = pneg %p34
      %p41 = scmp.eq.s32.totalorder %s13, 3
      %p42 = por %p40, %p41
      %p43 = scmp.ne.s32.totalorder %s35, %s38
      %p44 = scmp.eq.s32.totalorder %s13, 0
      %p45 = por %p43, %p44
      %p46 = scmp.ne.s32.totalorder %s35, %s38
      %p47 = scmp.eq.s32.totalorder %s18, 3
      %p48 = por %p46, %p47
      %p49 = scmp.ne.s32.totalorder %s38, %s39
      %p50 = scmp.eq.s32.totalorder %s18, 0
      %p51 = por %p49, %p50
      %p52 = scmp.ne.s32.totalorder %s38, %s39
      %p53 = scmp.eq.s32.totalorder %s19, 3
      %p54 = por %p52, %p53
      %p56 = scmp.ne.s32.totalorder %s39, %s55
      %p57 = scmp.eq.s32.totalorder %s19, 0
      %p58 = por %p56, %p57
      %s60 = sadd.s32 %s59, 1
      %p63 = scmp.eq.s32.totalorder %s13, 3
      %p64 = scmp.ne.s32.totalorder %s59, %s61
      %p65 = scmp.eq.s32.totalorder %s13, 0
      %p66 = por %p64, %p65
      %p67 = scmp.ne.s32.totalorder %s59, %s61
      %p68 = scmp.eq.s32.totalorder %s18, 3
      %p69 = por %p67, %p68
      %p70 = scmp.ne.s32.totalorder %s61, %s62
      %p71 = scmp.eq.s32.totalorder %s18, 0
      %p72 = por %p70, %p71
      %p73 = scmp.ne.s32.totalorder %s61, %s62
      %p74 = scmp.eq.s32.totalorder %s19, 3
      %p75 = por %p73, %p74
      %p77 = scmp.ne.s32.totalorder %s62, %s76
      %p78 = scmp.eq.s32.totalorder %s19, 0
      %p79 = por %p77, %p78
      %s81 = sadd.s32 %s80, 1
      %p84 = scmp.eq.s32.totalorder %s13, 3
      %p85 = scmp.ne.s32.totalorder %s80, %s82
      %p86 = scmp.eq.s32.totalorder %s13, 0
      %p87 = por %p85, %p86
      %p88 = scmp.ne.s32.totalorder %s80, %s82
      %p89 = scmp.eq.s32.totalorder %s18, 3
      %p90 = por %p88, %p89
      %p91 = scmp.ne.s32.totalorder %s82, %s83
      %p92 = scmp.eq.s32.totalorder %s18, 0
      %p93 = por %p91, %p92
      %p94 = scmp.ne.s32.totalorder %s82, %s83
      %p95 = scmp.eq.s32.totalorder %s19, 3
      %p96 = por %p94, %p95
      %p98 = scmp.ne.s32.totalorder %s83, %s97
      %p99 = scmp.eq.s32.totalorder %s19, 0
      %p100 = por %p98, %p99
      %s102 = sadd.s32 %s101, 1
      %p105 = scmp.eq.s32.totalorder %s13, 3
      %p106 = scmp.ne.s32.totalorder %s101, %s103
      %p107 = scmp.eq.s32.totalorder %s13, 0
      %p108 = por %p106, %p107
      %p109 = scmp.ne.s32.totalorder %s101, %s103
      %p110 = scmp.eq.s32.totalorder %s18, 3
      %p111 = por %p109, %p110
      %p112 = scmp.ne.s32.totalorder %s103, %s104
      %p113 = scmp.eq.s32.totalorder %s18, 0
      %p114 = por %p112, %p113
      %p115 = scmp.ne.s32.totalorder %s103, %s104
      %p116 = scmp.eq.s32.totalorder %s19, 3
      %p117 = por %p115, %p116
      %p119 = scmp.ne.s32.totalorder %s104, %s118
      %p120 = scmp.eq.s32.totalorder %s19, 0
      %p121 = por %p119, %p120
      %s123 = sadd.s32 %s122, 1
      %p126 = scmp.eq.s32.totalorder %s13, 3
      %p127 = scmp.ne.s32.totalorder %s122, %s124
      %p128 = scmp.eq.s32.totalorder %s13, 0
      %p129 = por %p127, %p128
      %p130 = scmp.ne.s32.totalorder %s122, %s124
      %p131 = scmp.eq.s32.totalorder %s18, 3
      %p132 = por %p130, %p131
      %p133 = scmp.ne.s32.totalorder %s124, %s125
      %p134 = scmp.eq.s32.totalorder %s18, 0
      %p135 = por %p133, %p134
      %p136 = scmp.ne.s32.totalorder %s124, %s125
      %p137 = scmp.eq.s32.totalorder %s19, 3
      %p138 = por %p136, %p137
      %p140 = scmp.ne.s32.totalorder %s125, %s139
      %p141 = scmp.eq.s32.totalorder %s19, 0
      %p142 = por %p140, %p141
      %s144 = sadd.s32 %s143, 1
      %p147 = scmp.eq.s32.totalorder %s13, 3
      %p148 = scmp.ne.s32.totalorder %s143, %s145
      %p149 = scmp.eq.s32.totalorder %s13, 0
      %p150 = por %p148, %p149
      %p151 = scmp.ne.s32.totalorder %s143, %s145
      %p152 = scmp.eq.s32.totalorder %s18, 3
      %p153 = por %p151, %p152
      %p154 = scmp.ne.s32.totalorder %s145, %s146
      %p155 = scmp.eq.s32.totalorder %s18, 0
      %p156 = por %p154, %p155
      %p157 = scmp.ne.s32.totalorder %s145, %s146
      %p158 = scmp.eq.s32.totalorder %s19, 3
      %p159 = por %p157, %p158
      %p161 = scmp.ne.s32.totalorder %s146, %s160
      %p162 = scmp.eq.s32.totalorder %s19, 0
      %p163 = por %p161, %p162
      %s165 = sadd.s32 %s164, 1
      %p168 = scmp.eq.s32.totalorder %s13, 3
      %p169 = scmp.ne.s32.totalorder %s164, %s166
      %p170 = scmp.eq.s32.totalorder %s13, 0
      %p171 = por %p169, %p170
      %p172 = scmp.ne.s32.totalorder %s164, %s166
      %p173 = scmp.eq.s32.totalorder %s18, 3
      %p174 = por %p172, %p173
      %p175 = scmp.ne.s32.totalorder %s166, %s167
      %p176 = scmp.eq.s32.totalorder %s18, 0
      %p177 = por %p175, %p176
      %p178 = scmp.ne.s32.totalorder %s166, %s167
      %p179 = scmp.eq.s32.totalorder %s19, 3
      %p180 = por %p178, %p179
      %p182 = scmp.ne.s32.totalorder %s167, %s181
      %p183 = scmp.eq.s32.totalorder %s19, 0
      %p184 = por %p182, %p183
      %s185 = ssub.s32 %s20, %s32
      %s186 = ssub.s32 %s21, %s28
      %s187 = sor.u32 %s185, %s186
      %p188 = scmp.eq.s32.totalorder %s187, 0
      %s190 = sadd.s32 %s189, 1
      %s191 = scalar_select %p188, %s189, %s190
      %p194 = pneg %p188
      %p195 = scmp.eq.s32.totalorder %s13, 3
      %p196 = por %p194, %p195
      %p197 = scmp.ne.s32.totalorder %s189, %s192
      %p198 = scmp.eq.s32.totalorder %s13, 0
      %p199 = por %p197, %p198
      %p200 = scmp.ne.s32.totalorder %s189, %s192
      %p201 = scmp.eq.s32.totalorder %s18, 3
      %p202 = por %p200, %p201
      %p203 = scmp.ne.s32.totalorder %s192, %s193
      %p204 = scmp.eq.s32.totalorder %s18, 0
      %p205 = por %p203, %p204
      %p206 = scmp.ne.s32.totalorder %s192, %s193
      %p207 = scmp.eq.s32.totalorder %s19, 3
      %p208 = por %p206, %p207
      %p210 = scmp.ne.s32.totalorder %s193, %s209
      %p211 = scmp.eq.s32.totalorder %s19, 0
      %p212 = por %p210, %p211
      %p213 = scmp.le.s32.totalorder 1, %s13
      %p214 = scmp.lt.s32.totalorder %s13, 5
      %p215 = pnand %p213, %p214
      %p216 = pneg %p215
      // Predicated region
      $region9: #{_attention_block.1} parent=5 // pred_check
        _
      $region10: #{_attention_block.1} parent=5 // pred_check_branch
        %218 = sbr.rel (%p215) target = $region12
      $region11: #{_attention_block.1} parent=5 // pred_region
        %s219 = ssub.s32 %s13, 1
        // Predicated region
        $region13: #{_attention_block.1} parent=11 // pred_check
          %p220 = pneg %p72
        $region14: #{_attention_block.1} parent=11 // pred_check_branch
          %222 = sbr.rel (%p220) target = $region16
        $region15: #{_attention_block.1} parent=11 // pred_region
          _
        $region16: #{_attention_block.1} parent=11 // pred_fallthru
          _
        // Predicated region
        $region17: #{_attention_block.1} parent=11 // pred_check
          %p223 = pneg %p93
        $region18: #{_attention_block.1} parent=11 // pred_check_branch
          %225 = sbr.rel (%p223) target = $region20
        $region19: #{_attention_block.1} parent=11 // pred_region
          _
        $region20: #{_attention_block.1} parent=11 // pred_fallthru
          _
        // Predicated region
        $region21: #{_attention_block.1} parent=11 // pred_check
          %p226 = pneg %p114
        $region22: #{_attention_block.1} parent=11 // pred_check_branch
          %228 = sbr.rel (%p226) target = $region24
        $region23: #{_attention_block.1} parent=11 // pred_region
          _
        $region24: #{_attention_block.1} parent=11 // pred_fallthru
          _
        // Predicated region
        $region25: #{_attention_block.1} parent=11 // pred_check
          %p229 = pneg %p135
        $region26: #{_attention_block.1} parent=11 // pred_check_branch
          %231 = sbr.rel (%p229) target = $region28
        $region27: #{_attention_block.1} parent=11 // pred_region
          _
        $region28: #{_attention_block.1} parent=11 // pred_fallthru
          _
        // Predicated region
        $region29: #{_attention_block.1} parent=11 // pred_check
          %p232 = pneg %p156
        $region30: #{_attention_block.1} parent=11 // pred_check_branch
          %234 = sbr.rel (%p232) target = $region32
        $region31: #{_attention_block.1} parent=11 // pred_region
          _
        $region32: #{_attention_block.1} parent=11 // pred_fallthru
          _
        // Predicated region
        $region33: #{_attention_block.1} parent=11 // pred_check
          %p235 = pneg %p177
        $region34: #{_attention_block.1} parent=11 // pred_check_branch
          %237 = sbr.rel (%p235) target = $region36
        $region35: #{_attention_block.1} parent=11 // pred_region
          _
        $region36: #{_attention_block.1} parent=11 // pred_fallthru
          _
      $region12: #{_attention_block.1} parent=5 // pred_fallthru
        _
      %p238 = scmp.lt.s32.totalorder %s13, 4
      // Predicated region
      $region37: #{_attention_block.1} parent=5 // pred_check
        %p239 = pneg %p238
      $region38: #{_attention_block.1} parent=5 // pred_check_branch
        %241 = sbr.rel (%p239) target = $region40
      $region39: #{_attention_block.1} parent=5 // pred_region
        // Predicated region
        $region41: #{_attention_block.1} parent=39 // pred_check
          %p242 = pneg %p45
        $region42: #{_attention_block.1} parent=39 // pred_check_branch
          %244 = sbr.rel (%p242) target = $region44
        $region43: #{_attention_block.1} parent=39 // pred_region
          %p245 = scmp.lt.s32.totalorder %s20, 1
          %s246 = scalar_select %p245, %s20, 1
          %s247 = smul.addr %s246, 32
          %s248 = smul.addr %s247, 8
          %s249 = scalar_lea.vmem %s0, %s248
        $region44: #{_attention_block.1} parent=39 // pred_fallthru
          _
      $region40: #{_attention_block.1} parent=5 // pred_fallthru
        _
      %p250 = scmp.le.s32.totalorder 1, %s13
      %p251 = scmp.lt.s32.totalorder %s13, 5
      %p252 = pnand %p250, %p251
      %p253 = pneg %p252
      // Predicated region
      $region45: #{_attention_block.1} parent=5 // pred_check
        _
      $region46: #{_attention_block.1} parent=5 // pred_check_branch
        %255 = sbr.rel (%p252) target = $region48
      $region47: #{_attention_block.1} parent=5 // pred_region
        %s256 = ssub.s32 %s13, 1
        %p257 = scmp.lt.s32.totalorder %s22, 1
        %s258 = scalar_select %p257, %s22, 1
        %s259 = smul.addr %s258, 32
        %s260 = smul.addr %s259, 8
        %s261 = scalar_lea.vmem %s0, %s260
        %p262 = pneg %p51
        %p263 = pneg %p48
        %p264 = pneg %p72
        %p265 = pneg %p69
        %p266 = pneg %p93
        %p267 = pneg %p90
        %p268 = pneg %p114
        %p269 = pneg %p111
        %p270 = pneg %p135
        %p271 = pneg %p132
        %p272 = pneg %p156
        %p273 = pneg %p153
        %p274 = pneg %p177
        %p275 = pneg %p174
        %p276 = pneg %p205
        %p277 = pneg %p202
        %s278 = sand.u32 %s192, 1
        %s279 = sand.u32 %s192, 1
        %s280 = smul.addr %s279, 128
        %s281 = scalar_lea.vmem [#allocation5], %s280
        %p282 = scmp.lt.s32.totalorder %s22, 1
        %s283 = scalar_select %p282, %s22, 1
        %s284 = smul.addr %s283, 32
        %s285 = smul.addr %s284, 8
        %s286 = scalar_lea.vmem %s0, %s285
        %p287 = scmp.eq.s32.totalorder %s23, 0
        // Predicated region
        $region49: #{_attention_block.1} parent=47 // pred_check
          %p288 = pneg %p287
        $region50: #{_attention_block.1} parent=47 // pred_check_branch
          %290 = sbr.rel (%p288) target = $region52
        $region51: #{_attention_block.1} parent=47 // pred_region
          %v291 = vld [vmem:[%s286] sm:$0xff]
          %v292 = vld [vmem:[%s286 + $0x8] sm:$0xff]
          %v293 = vld [vmem:[%s286 + $0x10] sm:$0xff]
          %v294 = vld [vmem:[%s286 + $0x18] sm:$0xff]
          %v295 = vld [vmem:[%s286 + $0x20] sm:$0xff]
          %v296 = vld [vmem:[%s286 + $0x28] sm:$0xff]
          %v297 = vld [vmem:[%s286 + $0x30] sm:$0xff]
          %v298 = vld [vmem:[%s286 + $0x38] sm:$0xff]
          %v299 = vld [vmem:[%s286 + $0x40] sm:$0xff]
          %v300 = vld [vmem:[%s286 + $0x48] sm:$0xff]
          %v301 = vld [vmem:[%s286 + $0x50] sm:$0xff]
          %v302 = vld [vmem:[%s286 + $0x58] sm:$0xff]
          %v303 = vld [vmem:[%s286 + $0x60] sm:$0xff]
          %v304 = vld [vmem:[%s286 + $0x68] sm:$0xff]
          %v305 = vld [vmem:[%s286 + $0x70] sm:$0xff]
          %v306 = vld [vmem:[%s286 + $0x78] sm:$0xff]
          %v307 = vld [vmem:[%s286 + $0x80] sm:$0xff]
          %v308 = vld [vmem:[%s286 + $0x88] sm:$0xff]
          %v309 = vld [vmem:[%s286 + $0x90] sm:$0xff]
          %v310 = vld [vmem:[%s286 + $0x98] sm:$0xff]
          %v311 = vld [vmem:[%s286 + $0xa0] sm:$0xff]
          %v312 = vld [vmem:[%s286 + $0xa8] sm:$0xff]
          %v313 = vld [vmem:[%s286 + $0xb0] sm:$0xff]
          %v314 = vld [vmem:[%s286 + $0xb8] sm:$0xff]
          %v315 = vld [vmem:[%s286 + $0xc0] sm:$0xff]
          %v316 = vld [vmem:[%s286 + $0xc8] sm:$0xff]
          %v317 = vld [vmem:[%s286 + $0xd0] sm:$0xff]
          %v318 = vld [vmem:[%s286 + $0xd8] sm:$0xff]
          %v319 = vld [vmem:[%s286 + $0xe0] sm:$0xff]
          %v320 = vld [vmem:[%s286 + $0xe8] sm:$0xff]
          %v321 = vld [vmem:[%s286 + $0xf0] sm:$0xff]
          %v322 = vld [vmem:[%s286 + $0xf8] sm:$0xff]
          %v323 = vld [vmem:[%s1] sm:$0xff]
          %v324 = vld [vmem:[%s1 + $0x8] sm:$0xff]
          %v325 = vld [vmem:[%s1 + $0x10] sm:$0xff]
          %v326 = vld [vmem:[%s1 + $0x18] sm:$0xff]
          %v327 = vld [vmem:[%s1 + $0x20] sm:$0xff]
          %v328 = vld [vmem:[%s1 + $0x28] sm:$0xff]
          %v329 = vld [vmem:[%s1 + $0x30] sm:$0xff]
          %v330 = vld [vmem:[%s1 + $0x38] sm:$0xff]
          %v331 = vld [vmem:[%s1 + $0x40] sm:$0xff]
          %v332 = vld [vmem:[%s1 + $0x48] sm:$0xff]
          %v333 = vld [vmem:[%s1 + $0x50] sm:$0xff]
          %v334 = vld [vmem:[%s1 + $0x58] sm:$0xff]
          %v335 = vld [vmem:[%s1 + $0x60] sm:$0xff]
          %v336 = vld [vmem:[%s1 + $0x68] sm:$0xff]
          %v337 = vld [vmem:[%s1 + $0x70] sm:$0xff]
          %v338 = vld [vmem:[%s1 + $0x78] sm:$0xff]
          %v339 = vld [vmem:[%s5] sm:$0x1]
          %v341 = vlaneseq
          %v342 = vshrl.u32 %v341, 7
          %v343 = vsub.s32 0, %v342
          %v344 = vrot.slane %v339, %v343
          %346 = vxpose.xlu0.b32.start [1/16] %v291, 128
          %347 = vxpose.xlu0.b32.cont [2/16] %v293, 128
          %348 = vxpose.xlu0.b32.cont [3/16] %v295, 128
          %349 = vxpose.xlu0.b32.cont [4/16] %v297, 128
          %350 = vxpose.xlu0.b32.cont [5/16] %v299, 128
          %351 = vxpose.xlu0.b32.cont [6/16] %v301, 128
          %352 = vxpose.xlu0.b32.cont [7/16] %v303, 128
          %353 = vxpose.xlu0.b32.cont [8/16] %v305, 128
          %354 = vxpose.xlu0.b32.cont [9/16] %v307, 128
          %355 = vxpose.xlu0.b32.cont [10/16] %v309, 128
          %356 = vxpose.xlu0.b32.cont [11/16] %v311, 128
          %357 = vxpose.xlu0.b32.cont [12/16] %v313, 128
          %358 = vxpose.xlu0.b32.cont [13/16] %v315, 128
          %359 = vxpose.xlu0.b32.cont [14/16] %v317, 128
          %360 = vxpose.xlu0.b32.cont [15/16] %v319, 128
          %361 = vxpose.xlu0.b32.end [16/16] %v321, 128
          %v362 = vpop.trf.xlu0
          %v363 = vpop.trf.xlu0
          %v364 = vpop.trf.xlu0
          %v365 = vpop.trf.xlu0
          %v366 = vpop.trf.xlu0
          %v367 = vpop.trf.xlu0
          %v368 = vpop.trf.xlu0
          %v369 = vpop.trf.xlu0
          %v370 = vpop.trf.xlu0
          %v371 = vpop.trf.xlu0
          %v372 = vpop.trf.xlu0
          %v373 = vpop.trf.xlu0
          %v374 = vpop.trf.xlu0
          %v375 = vpop.trf.xlu0
          %v376 = vpop.trf.xlu0
          %v377 = vpop.trf.xlu0
          %378 = vxpose.xlu0.b32.start [1/16] %v292, 128
          %379 = vxpose.xlu0.b32.cont [2/16] %v294, 128
          %380 = vxpose.xlu0.b32.cont [3/16] %v296, 128
          %381 = vxpose.xlu0.b32.cont [4/16] %v298, 128
          %382 = vxpose.xlu0.b32.cont [5/16] %v300, 128
          %383 = vxpose.xlu0.b32.cont [6/16] %v302, 128
          %384 = vxpose.xlu0.b32.cont [7/16] %v304, 128
          %385 = vxpose.xlu0.b32.cont [8/16] %v306, 128
          %386 = vxpose.xlu0.b32.cont [9/16] %v308, 128
          %387 = vxpose.xlu0.b32.cont [10/16] %v310, 128
          %388 = vxpose.xlu0.b32.cont [11/16] %v312, 128
          %389 = vxpose.xlu0.b32.cont [12/16] %v314, 128
          %390 = vxpose.xlu0.b32.cont [13/16] %v316, 128
          %391 = vxpose.xlu0.b32.cont [14/16] %v318, 128
          %392 = vxpose.xlu0.b32.cont [15/16] %v320, 128
          %393 = vxpose.xlu0.b32.end [16/16] %v322, 128
          %v394 = vpop.trf.xlu0
          %v395 = vpop.trf.xlu0
          %v396 = vpop.trf.xlu0
          %v397 = vpop.trf.xlu0
          %v398 = vpop.trf.xlu0
          %v399 = vpop.trf.xlu0
          %v400 = vpop.trf.xlu0
          %v401 = vpop.trf.xlu0
          %v402 = vpop.trf.xlu0
          %v403 = vpop.trf.xlu0
          %v404 = vpop.trf.xlu0
          %v405 = vpop.trf.xlu0
          %v406 = vpop.trf.xlu0
          %v407 = vpop.trf.xlu0
          %v408 = vpop.trf.xlu0
          %v409 = vpop.trf.xlu0
          %410 = vmatprep.subr.mxu0 0.0
          %411 = vmatpush1.xpose.msra.mxu0 %v338
          %412 = vmatprep.subr.mxu0 0.0
          %413 = vmatpush1.xpose.msra.mxu0 %v337
          %414 = vmatprep.subr.mxu0 0.0
          %415 = vmatpush1.xpose.msra.mxu0 %v336
          %416 = vmatprep.subr.mxu0 0.0
          %417 = vmatpush1.xpose.msra.mxu0 %v335
          %418 = vmatprep.subr.mxu0 0.0
          %419 = vmatpush1.xpose.msra.mxu0 %v334
          %420 = vmatprep.subr.mxu0 0.0
          %421 = vmatpush1.xpose.msra.mxu0 %v333
          %422 = vmatprep.subr.mxu0 0.0
          %423 = vmatpush1.xpose.msra.mxu0 %v332
          %424 = vmatprep.subr.mxu0 0.0
          %425 = vmatpush1.xpose.msra.mxu0 %v331
          %426 = vmatprep.subr.mxu0 0.0
          %427 = vmatpush1.xpose.msra.mxu0 %v330
          %428 = vmatprep.subr.mxu0 0.0
          %429 = vmatpush1.xpose.msra.mxu0 %v329
          %430 = vmatprep.subr.mxu0 0.0
          %431 = vmatpush1.xpose.msra.mxu0 %v328
          %432 = vmatprep.subr.mxu0 0.0
          %433 = vmatpush1.xpose.msra.mxu0 %v327
          %434 = vmatprep.subr.mxu0 0.0
          %435 = vmatpush1.xpose.msra.mxu0 %v326
          %436 = vmatprep.subr.mxu0 0.0
          %437 = vmatpush1.xpose.msra.mxu0 %v325
          %438 = vmatprep.subr.mxu0 0.0
          %439 = vmatpush1.xpose.msra.mxu0 %v324
          %440 = vmatprep.subr.mxu0 0.0
          %441 = vmatpush1.xpose.msra.mxu0 %v323
          %442 = vmatprep.subr.mxu0 0.0
          %443 = vmatpush2.xpose.msra.mxu0 0.0
          %444 = vmatprep.subr.mxu0 0.0
          %445 = vmatpush2.xpose.msra.mxu0 0.0
          %446 = vmatprep.subr.mxu0 0.0
          %447 = vmatpush2.xpose.msra.mxu0 0.0
          %448 = vmatprep.subr.mxu0 0.0
          %449 = vmatpush2.xpose.msra.mxu0 0.0
          %450 = vmatprep.subr.mxu0 0.0
          %451 = vmatpush2.xpose.msra.mxu0 0.0
          %452 = vmatprep.subr.mxu0 0.0
          %453 = vmatpush2.xpose.msra.mxu0 0.0
          %454 = vmatprep.subr.mxu0 0.0
          %455 = vmatpush2.xpose.msra.mxu0 0.0
          %456 = vmatprep.subr.mxu0 0.0
          %457 = vmatpush2.xpose.msra.mxu0 0.0
          %458 = vmatprep.subr.mxu0 0.0
          %459 = vmatpush2.xpose.msra.mxu0 0.0
          %460 = vmatprep.subr.mxu0 0.0
          %461 = vmatpush2.xpose.msra.mxu0 0.0
          %462 = vmatprep.subr.mxu0 0.0
          %463 = vmatpush2.xpose.msra.mxu0 0.0
          %464 = vmatprep.subr.mxu0 0.0
          %465 = vmatpush2.xpose.msra.mxu0 0.0
          %466 = vmatprep.subr.mxu0 0.0
          %467 = vmatpush2.xpose.msra.mxu0 0.0
          %468 = vmatprep.subr.mxu0 0.0
          %469 = vmatpush2.xpose.msra.mxu0 0.0
          %470 = vmatprep.subr.mxu0 0.0
          %471 = vmatpush2.xpose.msra.mxu0 0.0
          %472 = vmatprep.subr.mxu0 0.0
          %473 = vmatpush2.xpose.msra.mxu0 0.0
          %474 = vmatprep.mubr.f32.mxu0 0.0
          %475 = vmatmul.mubr.f32.gmra.mxu0 %v362
          %v476 = vpop.f32.mrf.mxu0
          %v477 = vadd.f32 %v344, %v476
          %v478 = vpop.f32.mrf.mxu0
          %479 = vmatprep.mubr.f32.mxu0 0.0
          %480 = vmatmul.mubr.f32.gmra.mxu0 %v363
          %v481 = vpop.f32.mrf.mxu0
          %v482 = vadd.f32 %v344, %v481
          %v483 = vpop.f32.mrf.mxu0
          %484 = vmatprep.mubr.f32.mxu0 0.0
          %485 = vmatmul.mubr.f32.gmra.mxu0 %v364
          %v486 = vpop.f32.mrf.mxu0
          %v487 = vadd.f32 %v344, %v486
          %v488 = vpop.f32.mrf.mxu0
          %489 = vmatprep.mubr.f32.mxu0 0.0
          %490 = vmatmul.mubr.f32.gmra.mxu0 %v365
          %v491 = vpop.f32.mrf.mxu0
          %v492 = vadd.f32 %v344, %v491
          %v493 = vpop.f32.mrf.mxu0
          %494 = vmatprep.mubr.f32.mxu0 0.0
          %495 = vmatmul.mubr.f32.gmra.mxu0 %v366
          %v496 = vpop.f32.mrf.mxu0
          %v497 = vadd.f32 %v344, %v496
          %v498 = vpop.f32.mrf.mxu0
          %499 = vmatprep.mubr.f32.mxu0 0.0
          %500 = vmatmul.mubr.f32.gmra.mxu0 %v367
          %v501 = vpop.f32.mrf.mxu0
          %v502 = vadd.f32 %v344, %v501
          %v503 = vpop.f32.mrf.mxu0
          %504 = vmatprep.mubr.f32.mxu0 0.0
          %505 = vmatmul.mubr.f32.gmra.mxu0 %v368
          %v506 = vpop.f32.mrf.mxu0
          %v507 = vadd.f32 %v344, %v506
          %v508 = vpop.f32.mrf.mxu0
          %509 = vmatprep.mubr.f32.mxu0 0.0
          %510 = vmatmul.mubr.f32.gmra.mxu0 %v369
          %v511 = vpop.f32.mrf.mxu0
          %v512 = vadd.f32 %v344, %v511
          %v513 = vpop.f32.mrf.mxu0
          %514 = vmatprep.mubr.f32.mxu0 0.0
          %515 = vmatmul.mubr.f32.gmra.mxu0 %v370
          %v516 = vpop.f32.mrf.mxu0
          %v517 = vadd.f32 %v344, %v516
          %v518 = vpop.f32.mrf.mxu0
          %519 = vmatprep.mubr.f32.mxu0 0.0
          %520 = vmatmul.mubr.f32.gmra.mxu0 %v371
          %v521 = vpop.f32.mrf.mxu0
          %v522 = vadd.f32 %v344, %v521
          %v523 = vpop.f32.mrf.mxu0
          %524 = vmatprep.mubr.f32.mxu0 0.0
          %525 = vmatmul.mubr.f32.gmra.mxu0 %v372
          %v526 = vpop.f32.mrf.mxu0
          %v527 = vadd.f32 %v344, %v526
          %v528 = vpop.f32.mrf.mxu0
          %529 = vmatprep.mubr.f32.mxu0 0.0
          %530 = vmatmul.mubr.f32.gmra.mxu0 %v373
          %v531 = vpop.f32.mrf.mxu0
          %v532 = vadd.f32 %v344, %v531
          %v533 = vpop.f32.mrf.mxu0
          %534 = vmatprep.mubr.f32.mxu0 0.0
          %535 = vmatmul.mubr.f32.gmra.mxu0 %v374
          %v536 = vpop.f32.mrf.mxu0
          %v537 = vadd.f32 %v344, %v536
          %v538 = vpop.f32.mrf.mxu0
          %539 = vmatprep.mubr.f32.mxu0 0.0
          %540 = vmatmul.mubr.f32.gmra.mxu0 %v375
          %v541 = vpop.f32.mrf.mxu0
          %v542 = vadd.f32 %v344, %v541
          %v543 = vpop.f32.mrf.mxu0
          %544 = vmatprep.mubr.f32.mxu0 0.0
          %545 = vmatmul.mubr.f32.gmra.mxu0 %v376
          %v546 = vpop.f32.mrf.mxu0
          %v547 = vadd.f32 %v344, %v546
          %v548 = vpop.f32.mrf.mxu0
          %549 = vmatprep.mubr.f32.mxu0 0.0
          %550 = vmatmul.mubr.f32.gmra.mxu0 %v377
          %v551 = vpop.f32.mrf.mxu0
          %v552 = vadd.f32 %v344, %v551
          %v553 = vpop.f32.mrf.mxu0
          %554 = vmatprep.mubr.f32.mxu0 0.0
          %555 = vmatmul.mubr.f32.gmra.mxu0 %v394
          %v556 = vpop.f32.mrf.mxu0
          %v557 = vadd.f32 %v344, %v556
          %v558 = vpop.f32.mrf.mxu0
          %559 = vmatprep.mubr.f32.mxu0 0.0
          %560 = vmatmul.mubr.f32.gmra.mxu0 %v395
          %v561 = vpop.f32.mrf.mxu0
          %v562 = vadd.f32 %v344, %v561
          %v563 = vpop.f32.mrf.mxu0
          %564 = vmatprep.mubr.f32.mxu0 0.0
          %565 = vmatmul.mubr.f32.gmra.mxu0 %v396
          %v566 = vpop.f32.mrf.mxu0
          %v567 = vadd.f32 %v344, %v566
          %v568 = vpop.f32.mrf.mxu0
          %569 = vmatprep.mubr.f32.mxu0 0.0
          %570 = vmatmul.mubr.f32.gmra.mxu0 %v397
          %v571 = vpop.f32.mrf.mxu0
          %v572 = vadd.f32 %v344, %v571
          %v573 = vpop.f32.mrf.mxu0
          %574 = vmatprep.mubr.f32.mxu0 0.0
          %575 = vmatmul.mubr.f32.gmra.mxu0 %v398
          %v576 = vpop.f32.mrf.mxu0
          %v577 = vadd.f32 %v344, %v576
          %v578 = vpop.f32.mrf.mxu0
          %579 = vmatprep.mubr.f32.mxu0 0.0
          %580 = vmatmul.mubr.f32.gmra.mxu0 %v399
          %v581 = vpop.f32.mrf.mxu0
          %v582 = vadd.f32 %v344, %v581
          %v583 = vpop.f32.mrf.mxu0
          %584 = vmatprep.mubr.f32.mxu0 0.0
          %585 = vmatmul.mubr.f32.gmra.mxu0 %v400
          %v586 = vpop.f32.mrf.mxu0
          %v587 = vadd.f32 %v344, %v586
          %v588 = vpop.f32.mrf.mxu0
          %589 = vmatprep.mubr.f32.mxu0 0.0
          %590 = vmatmul.mubr.f32.gmra.mxu0 %v401
          %v591 = vpop.f32.mrf.mxu0
          %v592 = vadd.f32 %v344, %v591
          %v593 = vpop.f32.mrf.mxu0
          %594 = vmatprep.mubr.f32.mxu0 0.0
          %595 = vmatmul.mubr.f32.gmra.mxu0 %v402
          %v596 = vpop.f32.mrf.mxu0
          %v597 = vadd.f32 %v344, %v596
          %v598 = vpop.f32.mrf.mxu0
          %599 = vmatprep.mubr.f32.mxu0 0.0
          %600 = vmatmul.mubr.f32.gmra.mxu0 %v403
          %v601 = vpop.f32.mrf.mxu0
          %v602 = vadd.f32 %v344, %v601
          %v603 = vpop.f32.mrf.mxu0
          %604 = vmatprep.mubr.f32.mxu0 0.0
          %605 = vmatmul.mubr.f32.gmra.mxu0 %v404
          %v606 = vpop.f32.mrf.mxu0
          %v607 = vadd.f32 %v344, %v606
          %v608 = vpop.f32.mrf.mxu0
          %609 = vmatprep.mubr.f32.mxu0 0.0
          %610 = vmatmul.mubr.f32.gmra.mxu0 %v405
          %v611 = vpop.f32.mrf.mxu0
          %v612 = vadd.f32 %v344, %v611
          %v613 = vpop.f32.mrf.mxu0
          %614 = vmatprep.mubr.f32.mxu0 0.0
          %615 = vmatmul.mubr.f32.gmra.mxu0 %v406
          %v616 = vpop.f32.mrf.mxu0
          %v617 = vadd.f32 %v344, %v616
          %v618 = vpop.f32.mrf.mxu0
          %619 = vmatprep.mubr.f32.mxu0 0.0
          %620 = vmatmul.mubr.f32.gmra.mxu0 %v407
          %v621 = vpop.f32.mrf.mxu0
          %v622 = vadd.f32 %v344, %v621
          %v623 = vpop.f32.mrf.mxu0
          %624 = vmatprep.mubr.f32.mxu0 0.0
          %625 = vmatmul.mubr.f32.gmra.mxu0 %v408
          %v626 = vpop.f32.mrf.mxu0
          %v627 = vadd.f32 %v344, %v626
          %v628 = vpop.f32.mrf.mxu0
          %629 = vmatprep.mubr.f32.mxu0 0.0
          %630 = vmatmul.mubr.f32.gmra.mxu0 %v409
          %v631 = vpop.f32.mrf.mxu0
          %v632 = vadd.f32 %v344, %v631
          %v633 = vpop.f32.mrf.mxu0
          %634 = vdwg.mxu0
          %635 = vst [vmem:[#allocation2] sm:$0xff] %v477
          %636 = vst [vmem:[#allocation2 + $0x8] sm:$0xff] %v482
          %637 = vst [vmem:[#allocation2 + $0x10] sm:$0xff] %v487
          %638 = vst [vmem:[#allocation2 + $0x18] sm:$0xff] %v492
          %639 = vst [vmem:[#allocation2 + $0x20] sm:$0xff] %v497
          %640 = vst [vmem:[#allocation2 + $0x28] sm:$0xff] %v502
          %641 = vst [vmem:[#allocation2 + $0x30] sm:$0xff] %v507
          %642 = vst [vmem:[#allocation2 + $0x38] sm:$0xff] %v512
          %643 = vst [vmem:[#allocation2 + $0x40] sm:$0xff] %v517
          %644 = vst [vmem:[#allocation2 + $0x48] sm:$0xff] %v522
          %645 = vst [vmem:[#allocation2 + $0x50] sm:$0xff] %v527
          %646 = vst [vmem:[#allocation2 + $0x58] sm:$0xff] %v532
          %647 = vst [vmem:[#allocation2 + $0x60] sm:$0xff] %v537
          %648 = vst [vmem:[#allocation2 + $0x68] sm:$0xff] %v542
          %649 = vst [vmem:[#allocation2 + $0x70] sm:$0xff] %v547
          %650 = vst [vmem:[#allocation2 + $0x78] sm:$0xff] %v552
          %651 = vst [vmem:[#allocation2 + $0x80] sm:$0xff] %v557
          %652 = vst [vmem:[#allocation2 + $0x88] sm:$0xff] %v562
          %653 = vst [vmem:[#allocation2 + $0x90] sm:$0xff] %v567
          %654 = vst [vmem:[#allocation2 + $0x98] sm:$0xff] %v572
          %655 = vst [vmem:[#allocation2 + $0xa0] sm:$0xff] %v577
          %656 = vst [vmem:[#allocation2 + $0xa8] sm:$0xff] %v582
          %657 = vst [vmem:[#allocation2 + $0xb0] sm:$0xff] %v587
          %658 = vst [vmem:[#allocation2 + $0xb8] sm:$0xff] %v592
          %659 = vst [vmem:[#allocation2 + $0xc0] sm:$0xff] %v597
          %660 = vst [vmem:[#allocation2 + $0xc8] sm:$0xff] %v602
          %661 = vst [vmem:[#allocation2 + $0xd0] sm:$0xff] %v607
          %662 = vst [vmem:[#allocation2 + $0xd8] sm:$0xff] %v612
          %663 = vst [vmem:[#allocation2 + $0xe0] sm:$0xff] %v617
          %664 = vst [vmem:[#allocation2 + $0xe8] sm:$0xff] %v622
          %665 = vst [vmem:[#allocation2 + $0xf0] sm:$0xff] %v627
          %666 = vst [vmem:[#allocation2 + $0xf8] sm:$0xff] %v632
          %v667 = vld [vmem:[%s2] sm:$0xff]
          %v668 = vld [vmem:[%s2 + $0x8] sm:$0xff]
          %v669 = vld [vmem:[%s2 + $0x10] sm:$0xff]
          %v670 = vld [vmem:[%s2 + $0x18] sm:$0xff]
          %v671 = vld [vmem:[%s2 + $0x20] sm:$0xff]
          %v672 = vld [vmem:[%s2 + $0x28] sm:$0xff]
          %v673 = vld [vmem:[%s2 + $0x30] sm:$0xff]
          %v674 = vld [vmem:[%s2 + $0x38] sm:$0xff]
          %v675 = vld [vmem:[%s2 + $0x40] sm:$0xff]
          %v676 = vld [vmem:[%s2 + $0x48] sm:$0xff]
          %v677 = vld [vmem:[%s2 + $0x50] sm:$0xff]
          %v678 = vld [vmem:[%s2 + $0x58] sm:$0xff]
          %v679 = vld [vmem:[%s2 + $0x60] sm:$0xff]
          %v680 = vld [vmem:[%s2 + $0x68] sm:$0xff]
          %v681 = vld [vmem:[%s2 + $0x70] sm:$0xff]
          %v682 = vld [vmem:[%s2 + $0x78] sm:$0xff]
          %v683 = vld [vmem:[%s6] sm:$0xff]
          %v684 = vld [vmem:[%s6 + $0x8] sm:$0xff]
          %v685 = vld [vmem:[%s6 + $0x10] sm:$0xff]
          %v686 = vld [vmem:[%s6 + $0x18] sm:$0xff]
          %v687 = vld [vmem:[%s6 + $0x20] sm:$0xff]
          %v688 = vld [vmem:[%s6 + $0x28] sm:$0xff]
          %v689 = vld [vmem:[%s6 + $0x30] sm:$0xff]
          %v690 = vld [vmem:[%s6 + $0x38] sm:$0xff]
          %v691 = vld [vmem:[%s6 + $0x40] sm:$0xff]
          %v692 = vld [vmem:[%s6 + $0x48] sm:$0xff]
          %v693 = vld [vmem:[%s6 + $0x50] sm:$0xff]
          %v694 = vld [vmem:[%s6 + $0x58] sm:$0xff]
          %v695 = vld [vmem:[%s6 + $0x60] sm:$0xff]
          %v696 = vld [vmem:[%s6 + $0x68] sm:$0xff]
          %v697 = vld [vmem:[%s6 + $0x70] sm:$0xff]
          %v698 = vld [vmem:[%s6 + $0x78] sm:$0xff]
          %700 = vset.pattern.permute.xlu0 0
          %701 = vperm.xlu0 %700, %v683
          %v702 = vpop.permute.xlu0 %701
          %705 = vset.pattern.permute.xlu0 0
          %706 = vperm.xlu0 %705, %v684
          %v707 = vpop.permute.xlu0 %706
          %710 = vset.pattern.permute.xlu0 0
          %711 = vperm.xlu0 %710, %v685
          %v712 = vpop.permute.xlu0 %711
          %715 = vset.pattern.permute.xlu0 0
          %716 = vperm.xlu0 %715, %v686
          %v717 = vpop.permute.xlu0 %716
          %720 = vset.pattern.permute.xlu0 0
          %721 = vperm.xlu0 %720, %v687
          %v722 = vpop.permute.xlu0 %721
          %725 = vset.pattern.permute.xlu0 0
          %726 = vperm.xlu0 %725, %v688
          %v727 = vpop.permute.xlu0 %726
          %730 = vset.pattern.permute.xlu0 0
          %731 = vperm.xlu0 %730, %v689
          %v732 = vpop.permute.xlu0 %731
          %735 = vset.pattern.permute.xlu0 0
          %736 = vperm.xlu0 %735, %v690
          %v737 = vpop.permute.xlu0 %736
          %740 = vset.pattern.permute.xlu0 0
          %741 = vperm.xlu0 %740, %v691
          %v742 = vpop.permute.xlu0 %741
          %745 = vset.pattern.permute.xlu0 0
          %746 = vperm.xlu0 %745, %v692
          %v747 = vpop.permute.xlu0 %746
          %750 = vset.pattern.permute.xlu0 0
          %751 = vperm.xlu0 %750, %v693
          %v752 = vpop.permute.xlu0 %751
          %755 = vset.pattern.permute.xlu0 0
          %756 = vperm.xlu0 %755, %v694
          %v757 = vpop.permute.xlu0 %756
          %760 = vset.pattern.permute.xlu0 0
          %761 = vperm.xlu0 %760, %v695
          %v762 = vpop.permute.xlu0 %761
          %765 = vset.pattern.permute.xlu0 0
          %766 = vperm.xlu0 %765, %v696
          %v767 = vpop.permute.xlu0 %766
          %770 = vset.pattern.permute.xlu0 0
          %771 = vperm.xlu0 %770, %v697
          %v772 = vpop.permute.xlu0 %771
          %775 = vset.pattern.permute.xlu0 0
          %776 = vperm.xlu0 %775, %v698
          %v777 = vpop.permute.xlu0 %776
          %779 = vmatprep.subr.mxu0 %v322
          %780 = vmatpush1.msra.mxu0 %v321
          %781 = vmatprep.subr.mxu0 %v320
          %782 = vmatpush1.msra.mxu0 %v319
          %783 = vmatprep.subr.mxu0 %v318
          %784 = vmatpush1.msra.mxu0 %v317
          %785 = vmatprep.subr.mxu0 %v316
          %786 = vmatpush1.msra.mxu0 %v315
          %787 = vmatprep.subr.mxu0 %v314
          %788 = vmatpush1.msra.mxu0 %v313
          %789 = vmatprep.subr.mxu0 %v312
          %790 = vmatpush1.msra.mxu0 %v311
          %791 = vmatprep.subr.mxu0 %v310
          %792 = vmatpush1.msra.mxu0 %v309
          %793 = vmatprep.subr.mxu0 %v308
          %794 = vmatpush1.msra.mxu0 %v307
          %795 = vmatprep.subr.mxu0 %v306
          %796 = vmatpush1.msra.mxu0 %v305
          %797 = vmatprep.subr.mxu0 %v304
          %798 = vmatpush1.msra.mxu0 %v303
          %799 = vmatprep.subr.mxu0 %v302
          %800 = vmatpush1.msra.mxu0 %v301
          %801 = vmatprep.subr.mxu0 %v300
          %802 = vmatpush1.msra.mxu0 %v299
          %803 = vmatprep.subr.mxu0 %v298
          %804 = vmatpush1.msra.mxu0 %v297
          %805 = vmatprep.subr.mxu0 %v296
          %806 = vmatpush1.msra.mxu0 %v295
          %807 = vmatprep.subr.mxu0 %v294
          %808 = vmatpush1.msra.mxu0 %v293
          %809 = vmatprep.subr.mxu0 %v292
          %810 = vmatpush1.msra.mxu0 %v291
          %811 = vmatprep.subr.mxu0 0.0
          %812 = vmatpush2.msra.mxu0 0.0
          %813 = vmatprep.subr.mxu0 0.0
          %814 = vmatpush2.msra.mxu0 0.0
          %815 = vmatprep.subr.mxu0 0.0
          %816 = vmatpush2.msra.mxu0 0.0
          %817 = vmatprep.subr.mxu0 0.0
          %818 = vmatpush2.msra.mxu0 0.0
          %819 = vmatprep.subr.mxu0 0.0
          %820 = vmatpush2.msra.mxu0 0.0
          %821 = vmatprep.subr.mxu0 0.0
          %822 = vmatpush2.msra.mxu0 0.0
          %823 = vmatprep.subr.mxu0 0.0
          %824 = vmatpush2.msra.mxu0 0.0
          %825 = vmatprep.subr.mxu0 0.0
          %826 = vmatpush2.msra.mxu0 0.0
          %827 = vmatprep.subr.mxu0 0.0
          %828 = vmatpush2.msra.mxu0 0.0
          %829 = vmatprep.subr.mxu0 0.0
          %830 = vmatpush2.msra.mxu0 0.0
          %831 = vmatprep.subr.mxu0 0.0
          %832 = vmatpush2.msra.mxu0 0.0
          %833 = vmatprep.subr.mxu0 0.0
          %834 = vmatpush2.msra.mxu0 0.0
          %835 = vmatprep.subr.mxu0 0.0
          %836 = vmatpush2.msra.mxu0 0.0
          %837 = vmatprep.subr.mxu0 0.0
          %838 = vmatpush2.msra.mxu0 0.0
          %839 = vmatprep.subr.mxu0 0.0
          %840 = vmatpush2.msra.mxu0 0.0
          %841 = vmatprep.subr.mxu0 0.0
          %842 = vmatpush2.msra.mxu0 0.0
          %843 = vmatprep.mubr.f32.mxu0 0.0
          %844 = vmatmul.mubr.f32.gmra.mxu0 %v667
          %v845 = vpop.f32.mrf.mxu0
          %v846 = vadd.f32 %v702, %v845
          %v847 = vpop.f32.mrf.mxu0
          %v848 = vadd.f32 %v702, %v847
          %849 = vmatprep.mubr.f32.mxu0 0.0
          %850 = vmatmul.mubr.f32.gmra.mxu0 %v668
          %v851 = vpop.f32.mrf.mxu0
          %v852 = vadd.f32 %v707, %v851
          %v853 = vpop.f32.mrf.mxu0
          %v854 = vadd.f32 %v707, %v853
          %855 = vmatprep.mubr.f32.mxu0 0.0
          %856 = vmatmul.mubr.f32.gmra.mxu0 %v669
          %v857 = vpop.f32.mrf.mxu0
          %v858 = vadd.f32 %v712, %v857
          %v859 = vpop.f32.mrf.mxu0
          %v860 = vadd.f32 %v712, %v859
          %861 = vmatprep.mubr.f32.mxu0 0.0
          %862 = vmatmul.mubr.f32.gmra.mxu0 %v670
          %v863 = vpop.f32.mrf.mxu0
          %v864 = vadd.f32 %v717, %v863
          %v865 = vpop.f32.mrf.mxu0
          %v866 = vadd.f32 %v717, %v865
          %867 = vmatprep.mubr.f32.mxu0 0.0
          %868 = vmatmul.mubr.f32.gmra.mxu0 %v671
          %v869 = vpop.f32.mrf.mxu0
          %v870 = vadd.f32 %v722, %v869
          %v871 = vpop.f32.mrf.mxu0
          %v872 = vadd.f32 %v722, %v871
          %873 = vmatprep.mubr.f32.mxu0 0.0
          %874 = vmatmul.mubr.f32.gmra.mxu0 %v672
          %v875 = vpop.f32.mrf.mxu0
          %v876 = vadd.f32 %v727, %v875
          %v877 = vpop.f32.mrf.mxu0
          %v878 = vadd.f32 %v727, %v877
          %879 = vmatprep.mubr.f32.mxu0 0.0
          %880 = vmatmul.mubr.f32.gmra.mxu0 %v673
          %v881 = vpop.f32.mrf.mxu0
          %v882 = vadd.f32 %v732, %v881
          %v883 = vpop.f32.mrf.mxu0
          %v884 = vadd.f32 %v732, %v883
          %885 = vmatprep.mubr.f32.mxu0 0.0
          %886 = vmatmul.mubr.f32.gmra.mxu0 %v674
          %v887 = vpop.f32.mrf.mxu0
          %v888 = vadd.f32 %v737, %v887
          %v889 = vpop.f32.mrf.mxu0
          %v890 = vadd.f32 %v737, %v889
          %891 = vmatprep.mubr.f32.mxu0 0.0
          %892 = vmatmul.mubr.f32.gmra.mxu0 %v675
          %v893 = vpop.f32.mrf.mxu0
          %v894 = vadd.f32 %v742, %v893
          %v895 = vpop.f32.mrf.mxu0
          %v896 = vadd.f32 %v742, %v895
          %897 = vmatprep.mubr.f32.mxu0 0.0
          %898 = vmatmul.mubr.f32.gmra.mxu0 %v676
          %v899 = vpop.f32.mrf.mxu0
          %v900 = vadd.f32 %v747, %v899
          %v901 = vpop.f32.mrf.mxu0
          %v902 = vadd.f32 %v747, %v901
          %903 = vmatprep.mubr.f32.mxu0 0.0
          %904 = vmatmul.mubr.f32.gmra.mxu0 %v677
          %v905 = vpop.f32.mrf.mxu0
          %v906 = vadd.f32 %v752, %v905
          %v907 = vpop.f32.mrf.mxu0
          %v908 = vadd.f32 %v752, %v907
          %909 = vmatprep.mubr.f32.mxu0 0.0
          %910 = vmatmul.mubr.f32.gmra.mxu0 %v678
          %v911 = vpop.f32.mrf.mxu0
          %v912 = vadd.f32 %v757, %v911
          %v913 = vpop.f32.mrf.mxu0
          %v914 = vadd.f32 %v757, %v913
          %915 = vmatprep.mubr.f32.mxu0 0.0
          %916 = vmatmul.mubr.f32.gmra.mxu0 %v679
          %v917 = vpop.f32.mrf.mxu0
          %v918 = vadd.f32 %v762, %v917
          %v919 = vpop.f32.mrf.mxu0
          %v920 = vadd.f32 %v762, %v919
          %921 = vmatprep.mubr.f32.mxu0 0.0
          %922 = vmatmul.mubr.f32.gmra.mxu0 %v680
          %v923 = vpop.f32.mrf.mxu0
          %v924 = vadd.f32 %v767, %v923
          %v925 = vpop.f32.mrf.mxu0
          %v926 = vadd.f32 %v767, %v925
          %927 = vmatprep.mubr.f32.mxu0 0.0
          %928 = vmatmul.mubr.f32.gmra.mxu0 %v681
          %v929 = vpop.f32.mrf.mxu0
          %v930 = vadd.f32 %v772, %v929
          %v931 = vpop.f32.mrf.mxu0
          %v932 = vadd.f32 %v772, %v931
          %933 = vmatprep.mubr.f32.mxu0 0.0
          %934 = vmatmul.mubr.f32.gmra.mxu0 %v682
          %v935 = vpop.f32.mrf.mxu0
          %v936 = vadd.f32 %v777, %v935
          %v937 = vpop.f32.mrf.mxu0
          %v938 = vadd.f32 %v777, %v937
          %939 = vdwg.mxu0
          %940 = vst [vmem:[#allocation3] sm:$0xff] %v846
          %941 = vst [vmem:[#allocation3 + $0x8] sm:$0xff] %v848
          %942 = vst [vmem:[#allocation3 + $0x10] sm:$0xff] %v852
          %943 = vst [vmem:[#allocation3 + $0x18] sm:$0xff] %v854
          %944 = vst [vmem:[#allocation3 + $0x20] sm:$0xff] %v858
          %945 = vst [vmem:[#allocation3 + $0x28] sm:$0xff] %v860
          %946 = vst [vmem:[#allocation3 + $0x30] sm:$0xff] %v864
          %947 = vst [vmem:[#allocation3 + $0x38] sm:$0xff] %v866
          %948 = vst [vmem:[#allocation3 + $0x40] sm:$0xff] %v870
          %949 = vst [vmem:[#allocation3 + $0x48] sm:$0xff] %v872
          %950 = vst [vmem:[#allocation3 + $0x50] sm:$0xff] %v876
          %951 = vst [vmem:[#allocation3 + $0x58] sm:$0xff] %v878
          %952 = vst [vmem:[#allocation3 + $0x60] sm:$0xff] %v882
          %953 = vst [vmem:[#allocation3 + $0x68] sm:$0xff] %v884
          %954 = vst [vmem:[#allocation3 + $0x70] sm:$0xff] %v888
          %955 = vst [vmem:[#allocation3 + $0x78] sm:$0xff] %v890
          %956 = vst [vmem:[#allocation3 + $0x80] sm:$0xff] %v894
          %957 = vst [vmem:[#allocation3 + $0x88] sm:$0xff] %v896
          %958 = vst [vmem:[#allocation3 + $0x90] sm:$0xff] %v900
          %959 = vst [vmem:[#allocation3 + $0x98] sm:$0xff] %v902
          %960 = vst [vmem:[#allocation3 + $0xa0] sm:$0xff] %v906
          %961 = vst [vmem:[#allocation3 + $0xa8] sm:$0xff] %v908
          %962 = vst [vmem:[#allocation3 + $0xb0] sm:$0xff] %v912
          %963 = vst [vmem:[#allocation3 + $0xb8] sm:$0xff] %v914
          %964 = vst [vmem:[#allocation3 + $0xc0] sm:$0xff] %v918
          %965 = vst [vmem:[#allocation3 + $0xc8] sm:$0xff] %v920
          %966 = vst [vmem:[#allocation3 + $0xd0] sm:$0xff] %v924
          %967 = vst [vmem:[#allocation3 + $0xd8] sm:$0xff] %v926
          %968 = vst [vmem:[#allocation3 + $0xe0] sm:$0xff] %v930
          %969 = vst [vmem:[#allocation3 + $0xe8] sm:$0xff] %v932
          %970 = vst [vmem:[#allocation3 + $0xf0] sm:$0xff] %v936
          %971 = vst [vmem:[#allocation3 + $0xf8] sm:$0xff] %v938
          %v972 = vld [vmem:[%s3] sm:$0xff]
          %v973 = vld [vmem:[%s3 + $0x8] sm:$0xff]
          %v974 = vld [vmem:[%s3 + $0x10] sm:$0xff]
          %v975 = vld [vmem:[%s3 + $0x18] sm:$0xff]
          %v976 = vld [vmem:[%s3 + $0x20] sm:$0xff]
          %v977 = vld [vmem:[%s3 + $0x28] sm:$0xff]
          %v978 = vld [vmem:[%s3 + $0x30] sm:$0xff]
          %v979 = vld [vmem:[%s3 + $0x38] sm:$0xff]
          %v980 = vld [vmem:[%s3 + $0x40] sm:$0xff]
          %v981 = vld [vmem:[%s3 + $0x48] sm:$0xff]
          %v982 = vld [vmem:[%s3 + $0x50] sm:$0xff]
          %v983 = vld [vmem:[%s3 + $0x58] sm:$0xff]
          %v984 = vld [vmem:[%s3 + $0x60] sm:$0xff]
          %v985 = vld [vmem:[%s3 + $0x68] sm:$0xff]
          %v986 = vld [vmem:[%s3 + $0x70] sm:$0xff]
          %v987 = vld [vmem:[%s3 + $0x78] sm:$0xff]
          %v988 = vld [vmem:[%s6] sm:$0xff]
          %v989 = vld [vmem:[%s6 + $0x8] sm:$0xff]
          %v990 = vld [vmem:[%s6 + $0x10] sm:$0xff]
          %v991 = vld [vmem:[%s6 + $0x18] sm:$0xff]
          %v992 = vld [vmem:[%s6 + $0x20] sm:$0xff]
          %v993 = vld [vmem:[%s6 + $0x28] sm:$0xff]
          %v994 = vld [vmem:[%s6 + $0x30] sm:$0xff]
          %v995 = vld [vmem:[%s6 + $0x38] sm:$0xff]
          %v996 = vld [vmem:[%s6 + $0x40] sm:$0xff]
          %v997 = vld [vmem:[%s6 + $0x48] sm:$0xff]
          %v998 = vld [vmem:[%s6 + $0x50] sm:$0xff]
          %v999 = vld [vmem:[%s6 + $0x58] sm:$0xff]
          %v1000 = vld [vmem:[%s6 + $0x60] sm:$0xff]
          %v1001 = vld [vmem:[%s6 + $0x68] sm:$0xff]
          %v1002 = vld [vmem:[%s6 + $0x70] sm:$0xff]
          %v1003 = vld [vmem:[%s6 + $0x78] sm:$0xff]
          %1005 = vset.pattern.permute.xlu0 1
          %1006 = vperm.xlu0 %1005, %v988
          %v1007 = vpop.permute.xlu0 %1006
          %1010 = vset.pattern.permute.xlu0 1
          %1011 = vperm.xlu0 %1010, %v989
          %v1012 = vpop.permute.xlu0 %1011
          %1015 = vset.pattern.permute.xlu0 1
          %1016 = vperm.xlu0 %1015, %v990
          %v1017 = vpop.permute.xlu0 %1016
          %1020 = vset.pattern.permute.xlu0 1
          %1021 = vperm.xlu0 %1020, %v991
          %v1022 = vpop.permute.xlu0 %1021
          %1025 = vset.pattern.permute.xlu0 1
          %1026 = vperm.xlu0 %1025, %v992
          %v1027 = vpop.permute.xlu0 %1026
          %1030 = vset.pattern.permute.xlu0 1
          %1031 = vperm.xlu0 %1030, %v993
          %v1032 = vpop.permute.xlu0 %1031
          %1035 = vset.pattern.permute.xlu0 1
          %1036 = vperm.xlu0 %1035, %v994
          %v1037 = vpop.permute.xlu0 %1036
          %1040 = vset.pattern.permute.xlu0 1
          %1041 = vperm.xlu0 %1040, %v995
          %v1042 = vpop.permute.xlu0 %1041
          %1045 = vset.pattern.permute.xlu0 1
          %1046 = vperm.xlu0 %1045, %v996
          %v1047 = vpop.permute.xlu0 %1046
          %1050 = vset.pattern.permute.xlu0 1
          %1051 = vperm.xlu0 %1050, %v997
          %v1052 = vpop.permute.xlu0 %1051
          %1055 = vset.pattern.permute.xlu0 1
          %1056 = vperm.xlu0 %1055, %v998
          %v1057 = vpop.permute.xlu0 %1056
          %1060 = vset.pattern.permute.xlu0 1
          %1061 = vperm.xlu0 %1060, %v999
          %v1062 = vpop.permute.xlu0 %1061
          %1065 = vset.pattern.permute.xlu0 1
          %1066 = vperm.xlu0 %1065, %v1000
          %v1067 = vpop.permute.xlu0 %1066
          %1070 = vset.pattern.permute.xlu0 1
          %1071 = vperm.xlu0 %1070, %v1001
          %v1072 = vpop.permute.xlu0 %1071
          %1075 = vset.pattern.permute.xlu0 1
          %1076 = vperm.xlu0 %1075, %v1002
          %v1077 = vpop.permute.xlu0 %1076
          %1080 = vset.pattern.permute.xlu0 1
          %1081 = vperm.xlu0 %1080, %v1003
          %v1082 = vpop.permute.xlu0 %1081
          %1084 = vmatprep.subr.mxu0 %v322
          %1085 = vmatpush1.msra.mxu0 %v321
          %1086 = vmatprep.subr.mxu0 %v320
          %1087 = vmatpush1.msra.mxu0 %v319
          %1088 = vmatprep.subr.mxu0 %v318
          %1089 = vmatpush1.msra.mxu0 %v317
          %1090 = vmatprep.subr.mxu0 %v316
          %1091 = vmatpush1.msra.mxu0 %v315
          %1092 = vmatprep.subr.mxu0 %v314
          %1093 = vmatpush1.msra.mxu0 %v313
          %1094 = vmatprep.subr.mxu0 %v312
          %1095 = vmatpush1.msra.mxu0 %v311
          %1096 = vmatprep.subr.mxu0 %v310
          %1097 = vmatpush1.msra.mxu0 %v309
          %1098 = vmatprep.subr.mxu0 %v308
          %1099 = vmatpush1.msra.mxu0 %v307
          %1100 = vmatprep.subr.mxu0 %v306
          %1101 = vmatpush1.msra.mxu0 %v305
          %1102 = vmatprep.subr.mxu0 %v304
          %1103 = vmatpush1.msra.mxu0 %v303
          %1104 = vmatprep.subr.mxu0 %v302
          %1105 = vmatpush1.msra.mxu0 %v301
          %1106 = vmatprep.subr.mxu0 %v300
          %1107 = vmatpush1.msra.mxu0 %v299
          %1108 = vmatprep.subr.mxu0 %v298
          %1109 = vmatpush1.msra.mxu0 %v297
          %1110 = vmatprep.subr.mxu0 %v296
          %1111 = vmatpush1.msra.mxu0 %v295
          %1112 = vmatprep.subr.mxu0 %v294
          %1113 = vmatpush1.msra.mxu0 %v293
          %1114 = vmatprep.subr.mxu0 %v292
          %1115 = vmatpush1.msra.mxu0 %v291
          %1116 = vmatprep.subr.mxu0 0.0
          %1117 = vmatpush2.msra.mxu0 0.0
          %1118 = vmatprep.subr.mxu0 0.0
          %1119 = vmatpush2.msra.mxu0 0.0
          %1120 = vmatprep.subr.mxu0 0.0
          %1121 = vmatpush2.msra.mxu0 0.0
          %1122 = vmatprep.subr.mxu0 0.0
          %1123 = vmatpush2.msra.mxu0 0.0
          %1124 = vmatprep.subr.mxu0 0.0
          %1125 = vmatpush2.msra.mxu0 0.0
          %1126 = vmatprep.subr.mxu0 0.0
          %1127 = vmatpush2.msra.mxu0 0.0
          %1128 = vmatprep.subr.mxu0 0.0
          %1129 = vmatpush2.msra.mxu0 0.0
          %1130 = vmatprep.subr.mxu0 0.0
          %1131 = vmatpush2.msra.mxu0 0.0
          %1132 = vmatprep.subr.mxu0 0.0
          %1133 = vmatpush2.msra.mxu0 0.0
          %1134 = vmatprep.subr.mxu0 0.0
          %1135 = vmatpush2.msra.mxu0 0.0
          %1136 = vmatprep.subr.mxu0 0.0
          %1137 = vmatpush2.msra.mxu0 0.0
          %1138 = vmatprep.subr.mxu0 0.0
          %1139 = vmatpush2.msra.mxu0 0.0
          %1140 = vmatprep.subr.mxu0 0.0
          %1141 = vmatpush2.msra.mxu0 0.0
          %1142 = vmatprep.subr.mxu0 0.0
          %1143 = vmatpush2.msra.mxu0 0.0
          %1144 = vmatprep.subr.mxu0 0.0
          %1145 = vmatpush2.msra.mxu0 0.0
          %1146 = vmatprep.subr.mxu0 0.0
          %1147 = vmatpush2.msra.mxu0 0.0
          %1148 = vmatprep.mubr.f32.mxu0 0.0
          %1149 = vmatmul.mubr.f32.gmra.mxu0 %v972
          %v1150 = vpop.f32.mrf.mxu0
          %v1151 = vadd.f32 %v1007, %v1150
          %v1152 = vpop.f32.mrf.mxu0
          %v1153 = vadd.f32 %v1007, %v1152
          %1154 = vmatprep.mubr.f32.mxu0 0.0
          %1155 = vmatmul.mubr.f32.gmra.mxu0 %v973
          %v1156 = vpop.f32.mrf.mxu0
          %v1157 = vadd.f32 %v1012, %v1156
          %v1158 = vpop.f32.mrf.mxu0
          %v1159 = vadd.f32 %v1012, %v1158
          %1160 = vmatprep.mubr.f32.mxu0 0.0
          %1161 = vmatmul.mubr.f32.gmra.mxu0 %v974
          %v1162 = vpop.f32.mrf.mxu0
          %v1163 = vadd.f32 %v1017, %v1162
          %v1164 = vpop.f32.mrf.mxu0
          %v1165 = vadd.f32 %v1017, %v1164
          %1166 = vmatprep.mubr.f32.mxu0 0.0
          %1167 = vmatmul.mubr.f32.gmra.mxu0 %v975
          %v1168 = vpop.f32.mrf.mxu0
          %v1169 = vadd.f32 %v1022, %v1168
          %v1170 = vpop.f32.mrf.mxu0
          %v1171 = vadd.f32 %v1022, %v1170
          %1172 = vmatprep.mubr.f32.mxu0 0.0
          %1173 = vmatmul.mubr.f32.gmra.mxu0 %v976
          %v1174 = vpop.f32.mrf.mxu0
          %v1175 = vadd.f32 %v1027, %v1174
          %v1176 = vpop.f32.mrf.mxu0
          %v1177 = vadd.f32 %v1027, %v1176
          %1178 = vmatprep.mubr.f32.mxu0 0.0
          %1179 = vmatmul.mubr.f32.gmra.mxu0 %v977
          %v1180 = vpop.f32.mrf.mxu0
          %v1181 = vadd.f32 %v1032, %v1180
          %v1182 = vpop.f32.mrf.mxu0
          %v1183 = vadd.f32 %v1032, %v1182
          %1184 = vmatprep.mubr.f32.mxu0 0.0
          %1185 = vmatmul.mubr.f32.gmra.mxu0 %v978
          %v1186 = vpop.f32.mrf.mxu0
          %v1187 = vadd.f32 %v1037, %v1186
          %v1188 = vpop.f32.mrf.mxu0
          %v1189 = vadd.f32 %v1037, %v1188
          %1190 = vmatprep.mubr.f32.mxu0 0.0
          %1191 = vmatmul.mubr.f32.gmra.mxu0 %v979
          %v1192 = vpop.f32.mrf.mxu0
          %v1193 = vadd.f32 %v1042, %v1192
          %v1194 = vpop.f32.mrf.mxu0
          %v1195 = vadd.f32 %v1042, %v1194
          %1196 = vmatprep.mubr.f32.mxu0 0.0
          %1197 = vmatmul.mubr.f32.gmra.mxu0 %v980
          %v1198 = vpop.f32.mrf.mxu0
          %v1199 = vadd.f32 %v1047, %v1198
          %v1200 = vpop.f32.mrf.mxu0
          %v1201 = vadd.f32 %v1047, %v1200
          %1202 = vmatprep.mubr.f32.mxu0 0.0
          %1203 = vmatmul.mubr.f32.gmra.mxu0 %v981
          %v1204 = vpop.f32.mrf.mxu0
          %v1205 = vadd.f32 %v1052, %v1204
          %v1206 = vpop.f32.mrf.mxu0
          %v1207 = vadd.f32 %v1052, %v1206
          %1208 = vmatprep.mubr.f32.mxu0 0.0
          %1209 = vmatmul.mubr.f32.gmra.mxu0 %v982
          %v1210 = vpop.f32.mrf.mxu0
          %v1211 = vadd.f32 %v1057, %v1210
          %v1212 = vpop.f32.mrf.mxu0
          %v1213 = vadd.f32 %v1057, %v1212
          %1214 = vmatprep.mubr.f32.mxu0 0.0
          %1215 = vmatmul.mubr.f32.gmra.mxu0 %v983
          %v1216 = vpop.f32.mrf.mxu0
          %v1217 = vadd.f32 %v1062, %v1216
          %v1218 = vpop.f32.mrf.mxu0
          %v1219 = vadd.f32 %v1062, %v1218
          %1220 = vmatprep.mubr.f32.mxu0 0.0
          %1221 = vmatmul.mubr.f32.gmra.mxu0 %v984
          %v1222 = vpop.f32.mrf.mxu0
          %v1223 = vadd.f32 %v1067, %v1222
          %v1224 = vpop.f32.mrf.mxu0
          %v1225 = vadd.f32 %v1067, %v1224
          %1226 = vmatprep.mubr.f32.mxu0 0.0
          %1227 = vmatmul.mubr.f32.gmra.mxu0 %v985
          %v1228 = vpop.f32.mrf.mxu0
          %v1229 = vadd.f32 %v1072, %v1228
          %v1230 = vpop.f32.mrf.mxu0
          %v1231 = vadd.f32 %v1072, %v1230
          %1232 = vmatprep.mubr.f32.mxu0 0.0
          %1233 = vmatmul.mubr.f32.gmra.mxu0 %v986
          %v1234 = vpop.f32.mrf.mxu0
          %v1235 = vadd.f32 %v1077, %v1234
          %v1236 = vpop.f32.mrf.mxu0
          %v1237 = vadd.f32 %v1077, %v1236
          %1238 = vmatprep.mubr.f32.mxu0 0.0
          %1239 = vmatmul.mubr.f32.gmra.mxu0 %v987
          %v1240 = vpop.f32.mrf.mxu0
          %v1241 = vadd.f32 %v1082, %v1240
          %v1242 = vpop.f32.mrf.mxu0
          %v1243 = vadd.f32 %v1082, %v1242
          %1244 = vdwg.mxu0
          %1245 = vst [vmem:[#allocation4] sm:$0xff] %v1151
          %1246 = vst [vmem:[#allocation4 + $0x8] sm:$0xff] %v1153
          %1247 = vst [vmem:[#allocation4 + $0x10] sm:$0xff] %v1157
          %1248 = vst [vmem:[#allocation4 + $0x18] sm:$0xff] %v1159
          %1249 = vst [vmem:[#allocation4 + $0x20] sm:$0xff] %v1163
          %1250 = vst [vmem:[#allocation4 + $0x28] sm:$0xff] %v1165
          %1251 = vst [vmem:[#allocation4 + $0x30] sm:$0xff] %v1169
          %1252 = vst [vmem:[#allocation4 + $0x38] sm:$0xff] %v1171
          %1253 = vst [vmem:[#allocation4 + $0x40] sm:$0xff] %v1175
          %1254 = vst [vmem:[#allocation4 + $0x48] sm:$0xff] %v1177
          %1255 = vst [vmem:[#allocation4 + $0x50] sm:$0xff] %v1181
          %1256 = vst [vmem:[#allocation4 + $0x58] sm:$0xff] %v1183
          %1257 = vst [vmem:[#allocation4 + $0x60] sm:$0xff] %v1187
          %1258 = vst [vmem:[#allocation4 + $0x68] sm:$0xff] %v1189
          %1259 = vst [vmem:[#allocation4 + $0x70] sm:$0xff] %v1193
          %1260 = vst [vmem:[#allocation4 + $0x78] sm:$0xff] %v1195
          %1261 = vst [vmem:[#allocation4 + $0x80] sm:$0xff] %v1199
          %1262 = vst [vmem:[#allocation4 + $0x88] sm:$0xff] %v1201
          %1263 = vst [vmem:[#allocation4 + $0x90] sm:$0xff] %v1205
          %1264 = vst [vmem:[#allocation4 + $0x98] sm:$0xff] %v1207
          %1265 = vst [vmem:[#allocation4 + $0xa0] sm:$0xff] %v1211
          %1266 = vst [vmem:[#allocation4 + $0xa8] sm:$0xff] %v1213
          %1267 = vst [vmem:[#allocation4 + $0xb0] sm:$0xff] %v1217
          %1268 = vst [vmem:[#allocation4 + $0xb8] sm:$0xff] %v1219
          %1269 = vst [vmem:[#allocation4 + $0xc0] sm:$0xff] %v1223
          %1270 = vst [vmem:[#allocation4 + $0xc8] sm:$0xff] %v1225
          %1271 = vst [vmem:[#allocation4 + $0xd0] sm:$0xff] %v1229
          %1272 = vst [vmem:[#allocation4 + $0xd8] sm:$0xff] %v1231
          %1273 = vst [vmem:[#allocation4 + $0xe0] sm:$0xff] %v1235
          %1274 = vst [vmem:[#allocation4 + $0xe8] sm:$0xff] %v1237
          %1275 = vst [vmem:[#allocation4 + $0xf0] sm:$0xff] %v1241
          %1276 = vst [vmem:[#allocation4 + $0xf8] sm:$0xff] %v1243
        $region52: #{_attention_block.1} parent=47 // pred_fallthru
          _
        %s1277 = smul.u32 %s23, 128
        %s1278 = scalar_lea.vmem [#allocation2], %s1277
        %v1279 = vld [vmem:[%s1278] sm:$0xff]
        %v1280 = vld [vmem:[%s1278 + $0x8] sm:$0xff]
        %v1281 = vld [vmem:[%s1278 + $0x10] sm:$0xff]
        %v1282 = vld [vmem:[%s1278 + $0x18] sm:$0xff]
        %v1283 = vld [vmem:[%s1278 + $0x20] sm:$0xff]
        %v1284 = vld [vmem:[%s1278 + $0x28] sm:$0xff]
        %v1285 = vld [vmem:[%s1278 + $0x30] sm:$0xff]
        %v1286 = vld [vmem:[%s1278 + $0x38] sm:$0xff]
        %v1287 = vld [vmem:[%s1278 + $0x40] sm:$0xff]
        %v1288 = vld [vmem:[%s1278 + $0x48] sm:$0xff]
        %v1289 = vld [vmem:[%s1278 + $0x50] sm:$0xff]
        %v1290 = vld [vmem:[%s1278 + $0x58] sm:$0xff]
        %v1291 = vld [vmem:[%s1278 + $0x60] sm:$0xff]
        %v1292 = vld [vmem:[%s1278 + $0x68] sm:$0xff]
        %v1293 = vld [vmem:[%s1278 + $0x70] sm:$0xff]
        %v1294 = vld [vmem:[%s1278 + $0x78] sm:$0xff]
        %v1295 = vld [vmem:[#allocation3] sm:$0xff]
        %v1296 = vld [vmem:[#allocation3 + $0x8] sm:$0xff]
        %v1297 = vld [vmem:[#allocation3 + $0x10] sm:$0xff]
        %v1298 = vld [vmem:[#allocation3 + $0x18] sm:$0xff]
        %v1299 = vld [vmem:[#allocation3 + $0x20] sm:$0xff]
        %v1300 = vld [vmem:[#allocation3 + $0x28] sm:$0xff]
        %v1301 = vld [vmem:[#allocation3 + $0x30] sm:$0xff]
        %v1302 = vld [vmem:[#allocation3 + $0x38] sm:$0xff]
        %v1303 = vld [vmem:[#allocation3 + $0x40] sm:$0xff]
        %v1304 = vld [vmem:[#allocation3 + $0x48] sm:$0xff]
        %v1305 = vld [vmem:[#allocation3 + $0x50] sm:$0xff]
        %v1306 = vld [vmem:[#allocation3 + $0x58] sm:$0xff]
        %v1307 = vld [vmem:[#allocation3 + $0x60] sm:$0xff]
        %v1308 = vld [vmem:[#allocation3 + $0x68] sm:$0xff]
        %v1309 = vld [vmem:[#allocation3 + $0x70] sm:$0xff]
        %v1310 = vld [vmem:[#allocation3 + $0x78] sm:$0xff]
        %v1311 = vld [vmem:[#allocation3 + $0x80] sm:$0xff]
        %v1312 = vld [vmem:[#allocation3 + $0x88] sm:$0xff]
        %v1313 = vld [vmem:[#allocation3 + $0x90] sm:$0xff]
        %v1314 = vld [vmem:[#allocation3 + $0x98] sm:$0xff]
        %v1315 = vld [vmem:[#allocation3 + $0xa0] sm:$0xff]
        %v1316 = vld [vmem:[#allocation3 + $0xa8] sm:$0xff]
        %v1317 = vld [vmem:[#allocation3 + $0xb0] sm:$0xff]
        %v1318 = vld [vmem:[#allocation3 + $0xb8] sm:$0xff]
        %v1319 = vld [vmem:[#allocation3 + $0xc0] sm:$0xff]
        %v1320 = vld [vmem:[#allocation3 + $0xc8] sm:$0xff]
        %v1321 = vld [vmem:[#allocation3 + $0xd0] sm:$0xff]
        %v1322 = vld [vmem:[#allocation3 + $0xd8] sm:$0xff]
        %v1323 = vld [vmem:[#allocation3 + $0xe0] sm:$0xff]
        %v1324 = vld [vmem:[#allocation3 + $0xe8] sm:$0xff]
        %v1325 = vld [vmem:[#allocation3 + $0xf0] sm:$0xff]
        %v1326 = vld [vmem:[#allocation3 + $0xf8] sm:$0xff]
        %1327 = vmatprep.subr.mxu0 %v1326
        %1328 = vmatpush1.msra.mxu0 %v1325
        %1329 = vmatprep.subr.mxu0 %v1324
        %1330 = vmatpush1.msra.mxu0 %v1323
        %1331 = vmatprep.subr.mxu0 %v1322
        %1332 = vmatpush1.msra.mxu0 %v1321
        %1333 = vmatprep.subr.mxu0 %v1320
        %1334 = vmatpush1.msra.mxu0 %v1319
        %1335 = vmatprep.subr.mxu0 %v1318
        %1336 = vmatpush1.msra.mxu0 %v1317
        %1337 = vmatprep.subr.mxu0 %v1316
        %1338 = vmatpush1.msra.mxu0 %v1315
        %1339 = vmatprep.subr.mxu0 %v1314
        %1340 = vmatpush1.msra.mxu0 %v1313
        %1341 = vmatprep.subr.mxu0 %v1312
        %1342 = vmatpush1.msra.mxu0 %v1311
        %1343 = vmatprep.subr.mxu0 %v1310
        %1344 = vmatpush1.msra.mxu0 %v1309
        %1345 = vmatprep.subr.mxu0 %v1308
        %1346 = vmatpush1.msra.mxu0 %v1307
        %1347 = vmatprep.subr.mxu0 %v1306
        %1348 = vmatpush1.msra.mxu0 %v1305
        %1349 = vmatprep.subr.mxu0 %v1304
        %1350 = vmatpush1.msra.mxu0 %v1303
        %1351 = vmatprep.subr.mxu0 %v1302
        %1352 = vmatpush1.msra.mxu0 %v1301
        %1353 = vmatprep.subr.mxu0 %v1300
        %1354 = vmatpush1.msra.mxu0 %v1299
        %1355 = vmatprep.subr.mxu0 %v1298
        %1356 = vmatpush1.msra.mxu0 %v1297
        %1357 = vmatprep.subr.mxu0 %v1296
        %1358 = vmatpush1.msra.mxu0 %v1295
        %1359 = vmatprep.subr.mxu0 0.0
        %1360 = vmatpush2.msra.mxu0 0.0
        %1361 = vmatprep.subr.mxu0 0.0
        %1362 = vmatpush2.msra.mxu0 0.0
        %1363 = vmatprep.subr.mxu0 0.0
        %1364 = vmatpush2.msra.mxu0 0.0
        %1365 = vmatprep.subr.mxu0 0.0
        %1366 = vmatpush2.msra.mxu0 0.0
        %1367 = vmatprep.subr.mxu0 0.0
        %1368 = vmatpush2.msra.mxu0 0.0
        %1369 = vmatprep.subr.mxu0 0.0
        %1370 = vmatpush2.msra.mxu0 0.0
        %1371 = vmatprep.subr.mxu0 0.0
        %1372 = vmatpush2.msra.mxu0 0.0
        %1373 = vmatprep.subr.mxu0 0.0
        %1374 = vmatpush2.msra.mxu0 0.0
        %1375 = vmatprep.subr.mxu0 0.0
        %1376 = vmatpush2.msra.mxu0 0.0
        %1377 = vmatprep.subr.mxu0 0.0
        %1378 = vmatpush2.msra.mxu0 0.0
        %1379 = vmatprep.subr.mxu0 0.0
        %1380 = vmatpush2.msra.mxu0 0.0
        %1381 = vmatprep.subr.mxu0 0.0
        %1382 = vmatpush2.msra.mxu0 0.0
        %1383 = vmatprep.subr.mxu0 0.0
        %1384 = vmatpush2.msra.mxu0 0.0
        %1385 = vmatprep.subr.mxu0 0.0
        %1386 = vmatpush2.msra.mxu0 0.0
        %1387 = vmatprep.subr.mxu0 0.0
        %1388 = vmatpush2.msra.mxu0 0.0
        %1389 = vmatprep.subr.mxu0 0.0
        %1390 = vmatpush2.msra.mxu0 0.0
        %1391 = vmatprep.mubr.f32.mxu0 0.0
        %1392 = vmatmul.mubr.f32.gmra.mxu0 %v1279
        %v1393 = vpop.f32.mrf.mxu0
        %v1394 = vadd.f32 0.0, %v1393
        %v1395 = vpop.f32.mrf.mxu0
        %v1396 = vadd.f32 0.0, %v1395
        %1397 = vmatprep.mubr.f32.mxu0 0.0
        %1398 = vmatmul.mubr.f32.gmra.mxu0 %v1280
        %v1399 = vpop.f32.mrf.mxu0
        %v1400 = vadd.f32 0.0, %v1399
        %v1401 = vpop.f32.mrf.mxu0
        %v1402 = vadd.f32 0.0, %v1401
        %1403 = vmatprep.mubr.f32.mxu0 0.0
        %1404 = vmatmul.mubr.f32.gmra.mxu0 %v1281
        %v1405 = vpop.f32.mrf.mxu0
        %v1406 = vadd.f32 0.0, %v1405
        %v1407 = vpop.f32.mrf.mxu0
        %v1408 = vadd.f32 0.0, %v1407
        %1409 = vmatprep.mubr.f32.mxu0 0.0
        %1410 = vmatmul.mubr.f32.gmra.mxu0 %v1282
        %v1411 = vpop.f32.mrf.mxu0
        %v1412 = vadd.f32 0.0, %v1411
        %v1413 = vpop.f32.mrf.mxu0
        %v1414 = vadd.f32 0.0, %v1413
        %1415 = vmatprep.mubr.f32.mxu0 0.0
        %1416 = vmatmul.mubr.f32.gmra.mxu0 %v1283
        %v1417 = vpop.f32.mrf.mxu0
        %v1418 = vadd.f32 0.0, %v1417
        %v1419 = vpop.f32.mrf.mxu0
        %v1420 = vadd.f32 0.0, %v1419
        %1421 = vmatprep.mubr.f32.mxu0 0.0
        %1422 = vmatmul.mubr.f32.gmra.mxu0 %v1284
        %v1423 = vpop.f32.mrf.mxu0
        %v1424 = vadd.f32 0.0, %v1423
        %v1425 = vpop.f32.mrf.mxu0
        %v1426 = vadd.f32 0.0, %v1425
        %1427 = vmatprep.mubr.f32.mxu0 0.0
        %1428 = vmatmul.mubr.f32.gmra.mxu0 %v1285
        %v1429 = vpop.f32.mrf.mxu0
        %v1430 = vadd.f32 0.0, %v1429
        %v1431 = vpop.f32.mrf.mxu0
        %v1432 = vadd.f32 0.0, %v1431
        %1433 = vmatprep.mubr.f32.mxu0 0.0
        %1434 = vmatmul.mubr.f32.gmra.mxu0 %v1286
        %v1435 = vpop.f32.mrf.mxu0
        %v1436 = vadd.f32 0.0, %v1435
        %v1437 = vpop.f32.mrf.mxu0
        %v1438 = vadd.f32 0.0, %v1437
        %1439 = vmatprep.mubr.f32.mxu0 0.0
        %1440 = vmatmul.mubr.f32.gmra.mxu0 %v1287
        %v1441 = vpop.f32.mrf.mxu0
        %v1442 = vadd.f32 0.0, %v1441
        %v1443 = vpop.f32.mrf.mxu0
        %v1444 = vadd.f32 0.0, %v1443
        %1445 = vmatprep.mubr.f32.mxu0 0.0
        %1446 = vmatmul.mubr.f32.gmra.mxu0 %v1288
        %v1447 = vpop.f32.mrf.mxu0
        %v1448 = vadd.f32 0.0, %v1447
        %v1449 = vpop.f32.mrf.mxu0
        %v1450 = vadd.f32 0.0, %v1449
        %1451 = vmatprep.mubr.f32.mxu0 0.0
        %1452 = vmatmul.mubr.f32.gmra.mxu0 %v1289
        %v1453 = vpop.f32.mrf.mxu0
        %v1454 = vadd.f32 0.0, %v1453
        %v1455 = vpop.f32.mrf.mxu0
        %v1456 = vadd.f32 0.0, %v1455
        %1457 = vmatprep.mubr.f32.mxu0 0.0
        %1458 = vmatmul.mubr.f32.gmra.mxu0 %v1290
        %v1459 = vpop.f32.mrf.mxu0
        %v1460 = vadd.f32 0.0, %v1459
        %v1461 = vpop.f32.mrf.mxu0
        %v1462 = vadd.f32 0.0, %v1461
        %1463 = vmatprep.mubr.f32.mxu0 0.0
        %1464 = vmatmul.mubr.f32.gmra.mxu0 %v1291
        %v1465 = vpop.f32.mrf.mxu0
        %v1466 = vadd.f32 0.0, %v1465
        %v1467 = vpop.f32.mrf.mxu0
        %v1468 = vadd.f32 0.0, %v1467
        %1469 = vmatprep.mubr.f32.mxu0 0.0
        %1470 = vmatmul.mubr.f32.gmra.mxu0 %v1292
        %v1471 = vpop.f32.mrf.mxu0
        %v1472 = vadd.f32 0.0, %v1471
        %v1473 = vpop.f32.mrf.mxu0
        %v1474 = vadd.f32 0.0, %v1473
        %1475 = vmatprep.mubr.f32.mxu0 0.0
        %1476 = vmatmul.mubr.f32.gmra.mxu0 %v1293
        %v1477 = vpop.f32.mrf.mxu0
        %v1478 = vadd.f32 0.0, %v1477
        %v1479 = vpop.f32.mrf.mxu0
        %v1480 = vadd.f32 0.0, %v1479
        %1481 = vmatprep.mubr.f32.mxu0 0.0
        %1482 = vmatmul.mubr.f32.gmra.mxu0 %v1294
        %v1483 = vpop.f32.mrf.mxu0
        %v1484 = vadd.f32 0.0, %v1483
        %v1485 = vpop.f32.mrf.mxu0
        %v1486 = vadd.f32 0.0, %v1485
        %1487 = vdwg.mxu0
        %v1488 = vmax.f32 %v1394, %v1396
        %1489 = vmax.xlane.f32.xlu0 %v1488
        %v1490 = vpop.xlane.xlu0 %1489
        %v1491 = vmax.f32 %v1400, %v1402
        %1492 = vmax.xlane.f32.xlu0 %v1491
        %v1493 = vpop.xlane.xlu0 %1492
        %v1494 = vmax.f32 %v1406, %v1408
        %1495 = vmax.xlane.f32.xlu0 %v1494
        %v1496 = vpop.xlane.xlu0 %1495
        %v1497 = vmax.f32 %v1412, %v1414
        %1498 = vmax.xlane.f32.xlu0 %v1497
        %v1499 = vpop.xlane.xlu0 %1498
        %v1500 = vmax.f32 %v1418, %v1420
        %1501 = vmax.xlane.f32.xlu0 %v1500
        %v1502 = vpop.xlane.xlu0 %1501
        %v1503 = vmax.f32 %v1424, %v1426
        %1504 = vmax.xlane.f32.xlu0 %v1503
        %v1505 = vpop.xlane.xlu0 %1504
        %v1506 = vmax.f32 %v1430, %v1432
        %1507 = vmax.xlane.f32.xlu0 %v1506
        %v1508 = vpop.xlane.xlu0 %1507
        %v1509 = vmax.f32 %v1436, %v1438
        %1510 = vmax.xlane.f32.xlu0 %v1509
        %v1511 = vpop.xlane.xlu0 %1510
        %v1512 = vmax.f32 %v1442, %v1444
        %1513 = vmax.xlane.f32.xlu0 %v1512
        %v1514 = vpop.xlane.xlu0 %1513
        %v1515 = vmax.f32 %v1448, %v1450
        %1516 = vmax.xlane.f32.xlu0 %v1515
        %v1517 = vpop.xlane.xlu0 %1516
        %v1518 = vmax.f32 %v1454, %v1456
        %1519 = vmax.xlane.f32.xlu0 %v1518
        %v1520 = vpop.xlane.xlu0 %1519
        %v1521 = vmax.f32 %v1460, %v1462
        %1522 = vmax.xlane.f32.xlu0 %v1521
        %v1523 = vpop.xlane.xlu0 %1522
        %v1524 = vmax.f32 %v1466, %v1468
        %1525 = vmax.xlane.f32.xlu0 %v1524
        %v1526 = vpop.xlane.xlu0 %1525
        %v1527 = vmax.f32 %v1472, %v1474
        %1528 = vmax.xlane.f32.xlu0 %v1527
        %v1529 = vpop.xlane.xlu0 %1528
        %v1530 = vmax.f32 %v1478, %v1480
        %1531 = vmax.xlane.f32.xlu0 %v1530
        %v1532 = vpop.xlane.xlu0 %1531
        %v1533 = vmax.f32 %v1484, %v1486
        %1534 = vmax.xlane.f32.xlu0 %v1533
        %v1535 = vpop.xlane.xlu0 %1534
        %v1536 = vsub.f32 %v1394, %v1490
        %v1537 = vsub.f32 %v1396, %v1490
        %v1538 = vsub.f32 %v1400, %v1493
        %v1539 = vsub.f32 %v1402, %v1493
        %v1540 = vsub.f32 %v1406, %v1496
        %v1541 = vsub.f32 %v1408, %v1496
        %v1542 = vsub.f32 %v1412, %v1499
        %v1543 = vsub.f32 %v1414, %v1499
        %v1544 = vsub.f32 %v1418, %v1502
        %v1545 = vsub.f32 %v1420, %v1502
        %v1546 = vsub.f32 %v1424, %v1505
        %v1547 = vsub.f32 %v1426, %v1505
        %v1548 = vsub.f32 %v1430, %v1508
        %v1549 = vsub.f32 %v1432, %v1508
        %v1550 = vsub.f32 %v1436, %v1511
        %v1551 = vsub.f32 %v1438, %v1511
        %v1552 = vsub.f32 %v1442, %v1514
        %v1553 = vsub.f32 %v1444, %v1514
        %v1554 = vsub.f32 %v1448, %v1517
        %v1555 = vsub.f32 %v1450, %v1517
        %v1556 = vsub.f32 %v1454, %v1520
        %v1557 = vsub.f32 %v1456, %v1520
        %v1558 = vsub.f32 %v1460, %v1523
        %v1559 = vsub.f32 %v1462, %v1523
        %v1560 = vsub.f32 %v1466, %v1526
        %v1561 = vsub.f32 %v1468, %v1526
        %v1562 = vsub.f32 %v1472, %v1529
        %v1563 = vsub.f32 %v1474, %v1529
        %v1564 = vsub.f32 %v1478, %v1532
        %v1565 = vsub.f32 %v1480, %v1532
        %v1566 = vsub.f32 %v1484, %v1535
        %v1567 = vsub.f32 %v1486, %v1535
        %v1568 = vmul.f32 %v1536, 1.442695
        %v1569 = vpow.pop %v1568
        %v1570 = vmul.f32 %v1537, 1.442695
        %v1571 = vpow.pop %v1570
        %v1572 = vmul.f32 %v1538, 1.442695
        %v1573 = vpow.pop %v1572
        %v1574 = vmul.f32 %v1539, 1.442695
        %v1575 = vpow.pop %v1574
        %v1576 = vmul.f32 %v1540, 1.442695
        %v1577 = vpow.pop %v1576
        %v1578 = vmul.f32 %v1541, 1.442695
        %v1579 = vpow.pop %v1578
        %v1580 = vmul.f32 %v1542, 1.442695
        %v1581 = vpow.pop %v1580
        %v1582 = vmul.f32 %v1543, 1.442695
        %v1583 = vpow.pop %v1582
        %v1584 = vmul.f32 %v1544, 1.442695
        %v1585 = vpow.pop %v1584
        %v1586 = vmul.f32 %v1545, 1.442695
        %v1587 = vpow.pop %v1586
        %v1588 = vmul.f32 %v1546, 1.442695
        %v1589 = vpow.pop %v1588
        %v1590 = vmul.f32 %v1547, 1.442695
        %v1591 = vpow.pop %v1590
        %v1592 = vmul.f32 %v1548, 1.442695
        %v1593 = vpow.pop %v1592
        %v1594 = vmul.f32 %v1549, 1.442695
        %v1595 = vpow.pop %v1594
        %v1596 = vmul.f32 %v1550, 1.442695
        %v1597 = vpow.pop %v1596
        %v1598 = vmul.f32 %v1551, 1.442695
        %v1599 = vpow.pop %v1598
        %v1600 = vmul.f32 %v1552, 1.442695
        %v1601 = vpow.pop %v1600
        %v1602 = vmul.f32 %v1553, 1.442695
        %v1603 = vpow.pop %v1602
        %v1604 = vmul.f32 %v1554, 1.442695
        %v1605 = vpow.pop %v1604
        %v1606 = vmul.f32 %v1555, 1.442695
        %v1607 = vpow.pop %v1606
        %v1608 = vmul.f32 %v1556, 1.442695
        %v1609 = vpow.pop %v1608
        %v1610 = vmul.f32 %v1557, 1.442695
        %v1611 = vpow.pop %v1610
        %v1612 = vmul.f32 %v1558, 1.442695
        %v1613 = vpow.pop %v1612
        %v1614 = vmul.f32 %v1559, 1.442695
        %v1615 = vpow.pop %v1614
        %v1616 = vmul.f32 %v1560, 1.442695
        %v1617 = vpow.pop %v1616
        %v1618 = vmul.f32 %v1561, 1.442695
        %v1619 = vpow.pop %v1618
        %v1620 = vmul.f32 %v1562, 1.442695
        %v1621 = vpow.pop %v1620
        %v1622 = vmul.f32 %v1563, 1.442695
        %v1623 = vpow.pop %v1622
        %v1624 = vmul.f32 %v1564, 1.442695
        %v1625 = vpow.pop %v1624
        %v1626 = vmul.f32 %v1565, 1.442695
        %v1627 = vpow.pop %v1626
        %v1628 = vmul.f32 %v1566, 1.442695
        %v1629 = vpow.pop %v1628
        %v1630 = vmul.f32 %v1567, 1.442695
        %v1631 = vpow.pop %v1630
        %v1632 = vadd.f32 %v1569, %v1571
        %1633 = vadd.xlane.f32.xlu0 %v1632
        %v1634 = vpop.xlane.xlu0 %1633
        %v1635 = vadd.f32 %v1573, %v1575
        %1636 = vadd.xlane.f32.xlu0 %v1635
        %v1637 = vpop.xlane.xlu0 %1636
        %v1638 = vadd.f32 %v1577, %v1579
        %1639 = vadd.xlane.f32.xlu0 %v1638
        %v1640 = vpop.xlane.xlu0 %1639
        %v1641 = vadd.f32 %v1581, %v1583
        %1642 = vadd.xlane.f32.xlu0 %v1641
        %v1643 = vpop.xlane.xlu0 %1642
        %v1644 = vadd.f32 %v1585, %v1587
        %1645 = vadd.xlane.f32.xlu0 %v1644
        %v1646 = vpop.xlane.xlu0 %1645
        %v1647 = vadd.f32 %v1589, %v1591
        %1648 = vadd.xlane.f32.xlu0 %v1647
        %v1649 = vpop.xlane.xlu0 %1648
        %v1650 = vadd.f32 %v1593, %v1595
        %1651 = vadd.xlane.f32.xlu0 %v1650
        %v1652 = vpop.xlane.xlu0 %1651
        %v1653 = vadd.f32 %v1597, %v1599
        %1654 = vadd.xlane.f32.xlu0 %v1653
        %v1655 = vpop.xlane.xlu0 %1654
        %v1656 = vadd.f32 %v1601, %v1603
        %1657 = vadd.xlane.f32.xlu0 %v1656
        %v1658 = vpop.xlane.xlu0 %1657
        %v1659 = vadd.f32 %v1605, %v1607
        %1660 = vadd.xlane.f32.xlu0 %v1659
        %v1661 = vpop.xlane.xlu0 %1660
        %v1662 = vadd.f32 %v1609, %v1611
        %1663 = vadd.xlane.f32.xlu0 %v1662
        %v1664 = vpop.xlane.xlu0 %1663
        %v1665 = vadd.f32 %v1613, %v1615
        %1666 = vadd.xlane.f32.xlu0 %v1665
        %v1667 = vpop.xlane.xlu0 %1666
        %v1668 = vadd.f32 %v1617, %v1619
        %1669 = vadd.xlane.f32.xlu0 %v1668
        %v1670 = vpop.xlane.xlu0 %1669
        %v1671 = vadd.f32 %v1621, %v1623
        %1672 = vadd.xlane.f32.xlu0 %v1671
        %v1673 = vpop.xlane.xlu0 %1672
        %v1674 = vadd.f32 %v1625, %v1627
        %1675 = vadd.xlane.f32.xlu0 %v1674
        %v1676 = vpop.xlane.xlu0 %1675
        %v1677 = vadd.f32 %v1629, %v1631
        %1678 = vadd.xlane.f32.xlu0 %v1677
        %v1679 = vpop.xlane.xlu0 %1678
        %v1680 = vrcp.pop %v1634
        %v1681 = vmul.f32 %v1569, %v1680
        %v1682 = vmul.f32 %v1571, %v1680
        %v1683 = vrcp.pop %v1637
        %v1684 = vmul.f32 %v1573, %v1683
        %v1685 = vmul.f32 %v1575, %v1683
        %v1686 = vrcp.pop %v1640
        %v1687 = vmul.f32 %v1577, %v1686
        %v1688 = vmul.f32 %v1579, %v1686
        %v1689 = vrcp.pop %v1643
        %v1690 = vmul.f32 %v1581, %v1689
        %v1691 = vmul.f32 %v1583, %v1689
        %v1692 = vrcp.pop %v1646
        %v1693 = vmul.f32 %v1585, %v1692
        %v1694 = vmul.f32 %v1587, %v1692
        %v1695 = vrcp.pop %v1649
        %v1696 = vmul.f32 %v1589, %v1695
        %v1697 = vmul.f32 %v1591, %v1695
        %v1698 = vrcp.pop %v1652
        %v1699 = vmul.f32 %v1593, %v1698
        %v1700 = vmul.f32 %v1595, %v1698
        %v1701 = vrcp.pop %v1655
        %v1702 = vmul.f32 %v1597, %v1701
        %v1703 = vmul.f32 %v1599, %v1701
        %v1704 = vrcp.pop %v1658
        %v1705 = vmul.f32 %v1601, %v1704
        %v1706 = vmul.f32 %v1603, %v1704
        %v1707 = vrcp.pop %v1661
        %v1708 = vmul.f32 %v1605, %v1707
        %v1709 = vmul.f32 %v1607, %v1707
        %v1710 = vrcp.pop %v1664
        %v1711 = vmul.f32 %v1609, %v1710
        %v1712 = vmul.f32 %v1611, %v1710
        %v1713 = vrcp.pop %v1667
        %v1714 = vmul.f32 %v1613, %v1713
        %v1715 = vmul.f32 %v1615, %v1713
        %v1716 = vrcp.pop %v1670
        %v1717 = vmul.f32 %v1617, %v1716
        %v1718 = vmul.f32 %v1619, %v1716
        %v1719 = vrcp.pop %v1673
        %v1720 = vmul.f32 %v1621, %v1719
        %v1721 = vmul.f32 %v1623, %v1719
        %v1722 = vrcp.pop %v1676
        %v1723 = vmul.f32 %v1625, %v1722
        %v1724 = vmul.f32 %v1627, %v1722
        %v1725 = vrcp.pop %v1679
        %v1726 = vmul.f32 %v1629, %v1725
        %v1727 = vmul.f32 %v1631, %v1725
        %v1728 = vld [vmem:[#allocation4] sm:$0xff]
        %v1729 = vld [vmem:[#allocation4 + $0x8] sm:$0xff]
        %v1730 = vld [vmem:[#allocation4 + $0x10] sm:$0xff]
        %v1731 = vld [vmem:[#allocation4 + $0x18] sm:$0xff]
        %v1732 = vld [vmem:[#allocation4 + $0x20] sm:$0xff]
        %v1733 = vld [vmem:[#allocation4 + $0x28] sm:$0xff]
        %v1734 = vld [vmem:[#allocation4 + $0x30] sm:$0xff]
        %v1735 = vld [vmem:[#allocation4 + $0x38] sm:$0xff]
        %v1736 = vld [vmem:[#allocation4 + $0x40] sm:$0xff]
        %v1737 = vld [vmem:[#allocation4 + $0x48] sm:$0xff]
        %v1738 = vld [vmem:[#allocation4 + $0x50] sm:$0xff]
        %v1739 = vld [vmem:[#allocation4 + $0x58] sm:$0xff]
        %v1740 = vld [vmem:[#allocation4 + $0x60] sm:$0xff]
        %v1741 = vld [vmem:[#allocation4 + $0x68] sm:$0xff]
        %v1742 = vld [vmem:[#allocation4 + $0x70] sm:$0xff]
        %v1743 = vld [vmem:[#allocation4 + $0x78] sm:$0xff]
        %v1744 = vld [vmem:[#allocation4 + $0x80] sm:$0xff]
        %v1745 = vld [vmem:[#allocation4 + $0x88] sm:$0xff]
        %v1746 = vld [vmem:[#allocation4 + $0x90] sm:$0xff]
        %v1747 = vld [vmem:[#allocation4 + $0x98] sm:$0xff]
        %v1748 = vld [vmem:[#allocation4 + $0xa0] sm:$0xff]
        %v1749 = vld [vmem:[#allocation4 + $0xa8] sm:$0xff]
        %v1750 = vld [vmem:[#allocation4 + $0xb0] sm:$0xff]
        %v1751 = vld [vmem:[#allocation4 + $0xb8] sm:$0xff]
        %v1752 = vld [vmem:[#allocation4 + $0xc0] sm:$0xff]
        %v1753 = vld [vmem:[#allocation4 + $0xc8] sm:$0xff]
        %v1754 = vld [vmem:[#allocation4 + $0xd0] sm:$0xff]
        %v1755 = vld [vmem:[#allocation4 + $0xd8] sm:$0xff]
        %v1756 = vld [vmem:[#allocation4 + $0xe0] sm:$0xff]
        %v1757 = vld [vmem:[#allocation4 + $0xe8] sm:$0xff]
        %v1758 = vld [vmem:[#allocation4 + $0xf0] sm:$0xff]
        %v1759 = vld [vmem:[#allocation4 + $0xf8] sm:$0xff]
        %1760 = vmatprep.subr.mxu0 %v1727
        %1761 = vmatpush1.xpose.msra.mxu0 %v1726
        %1762 = vmatprep.subr.mxu0 %v1724
        %1763 = vmatpush1.xpose.msra.mxu0 %v1723
        %1764 = vmatprep.subr.mxu0 %v1721
        %1765 = vmatpush1.xpose.msra.mxu0 %v1720
        %1766 = vmatprep.subr.mxu0 %v1718
        %1767 = vmatpush1.xpose.msra.mxu0 %v1717
        %1768 = vmatprep.subr.mxu0 %v1715
        %1769 = vmatpush1.xpose.msra.mxu0 %v1714
        %1770 = vmatprep.subr.mxu0 %v1712
        %1771 = vmatpush1.xpose.msra.mxu0 %v1711
        %1772 = vmatprep.subr.mxu0 %v1709
        %1773 = vmatpush1.xpose.msra.mxu0 %v1708
        %1774 = vmatprep.subr.mxu0 %v1706
        %1775 = vmatpush1.xpose.msra.mxu0 %v1705
        %1776 = vmatprep.subr.mxu0 %v1703
        %1777 = vmatpush1.xpose.msra.mxu0 %v1702
        %1778 = vmatprep.subr.mxu0 %v1700
        %1779 = vmatpush1.xpose.msra.mxu0 %v1699
        %1780 = vmatprep.subr.mxu0 %v1697
        %1781 = vmatpush1.xpose.msra.mxu0 %v1696
        %1782 = vmatprep.subr.mxu0 %v1694
        %1783 = vmatpush1.xpose.msra.mxu0 %v1693
        %1784 = vmatprep.subr.mxu0 %v1691
        %1785 = vmatpush1.xpose.msra.mxu0 %v1690
        %1786 = vmatprep.subr.mxu0 %v1688
        %1787 = vmatpush1.xpose.msra.mxu0 %v1687
        %1788 = vmatprep.subr.mxu0 %v1685
        %1789 = vmatpush1.xpose.msra.mxu0 %v1684
        %1790 = vmatprep.subr.mxu0 %v1682
        %1791 = vmatpush1.xpose.msra.mxu0 %v1681
        %1792 = vmatprep.subr.mxu0 0.0
        %1793 = vmatpush2.xpose.msra.mxu0 0.0
        %1794 = vmatprep.subr.mxu0 0.0
        %1795 = vmatpush2.xpose.msra.mxu0 0.0
        %1796 = vmatprep.subr.mxu0 0.0
        %1797 = vmatpush2.xpose.msra.mxu0 0.0
        %1798 = vmatprep.subr.mxu0 0.0
        %1799 = vmatpush2.xpose.msra.mxu0 0.0
        %1800 = vmatprep.subr.mxu0 0.0
        %1801 = vmatpush2.xpose.msra.mxu0 0.0
        %1802 = vmatprep.subr.mxu0 0.0
        %1803 = vmatpush2.xpose.msra.mxu0 0.0
        %1804 = vmatprep.subr.mxu0 0.0
        %1805 = vmatpush2.xpose.msra.mxu0 0.0
        %1806 = vmatprep.subr.mxu0 0.0
        %1807 = vmatpush2.xpose.msra.mxu0 0.0
        %1808 = vmatprep.subr.mxu0 0.0
        %1809 = vmatpush2.xpose.msra.mxu0 0.0
        %1810 = vmatprep.subr.mxu0 0.0
        %1811 = vmatpush2.xpose.msra.mxu0 0.0
        %1812 = vmatprep.subr.mxu0 0.0
        %1813 = vmatpush2.xpose.msra.mxu0 0.0
        %1814 = vmatprep.subr.mxu0 0.0
        %1815 = vmatpush2.xpose.msra.mxu0 0.0
        %1816 = vmatprep.subr.mxu0 0.0
        %1817 = vmatpush2.xpose.msra.mxu0 0.0
        %1818 = vmatprep.subr.mxu0 0.0
        %1819 = vmatpush2.xpose.msra.mxu0 0.0
        %1820 = vmatprep.subr.mxu0 0.0
        %1821 = vmatpush2.xpose.msra.mxu0 0.0
        %1822 = vmatprep.subr.mxu0 0.0
        %1823 = vmatpush2.xpose.msra.mxu0 0.0
        %1824 = vmatprep.mubr.f32.mxu0 %v1729
        %1825 = vmatmul.mubr.f32.gmra.mxu0 %v1728
        %v1826 = vpop.f32.mrf.mxu0
        %v1827 = vadd.f32 0.0, %v1826
        %v1828 = vpop.f32.mrf.mxu0
        %1829 = vmatprep.mubr.f32.mxu0 %v1731
        %1830 = vmatmul.mubr.f32.gmra.mxu0 %v1730
        %v1831 = vpop.f32.mrf.mxu0
        %v1832 = vadd.f32 0.0, %v1831
        %v1833 = vpop.f32.mrf.mxu0
        %1834 = vmatprep.mubr.f32.mxu0 %v1733
        %1835 = vmatmul.mubr.f32.gmra.mxu0 %v1732
        %v1836 = vpop.f32.mrf.mxu0
        %v1837 = vadd.f32 0.0, %v1836
        %v1838 = vpop.f32.mrf.mxu0
        %1839 = vmatprep.mubr.f32.mxu0 %v1735
        %1840 = vmatmul.mubr.f32.gmra.mxu0 %v1734
        %v1841 = vpop.f32.mrf.mxu0
        %v1842 = vadd.f32 0.0, %v1841
        %v1843 = vpop.f32.mrf.mxu0
        %1844 = vmatprep.mubr.f32.mxu0 %v1737
        %1845 = vmatmul.mubr.f32.gmra.mxu0 %v1736
        %v1846 = vpop.f32.mrf.mxu0
        %v1847 = vadd.f32 0.0, %v1846
        %v1848 = vpop.f32.mrf.mxu0
        %1849 = vmatprep.mubr.f32.mxu0 %v1739
        %1850 = vmatmul.mubr.f32.gmra.mxu0 %v1738
        %v1851 = vpop.f32.mrf.mxu0
        %v1852 = vadd.f32 0.0, %v1851
        %v1853 = vpop.f32.mrf.mxu0
        %1854 = vmatprep.mubr.f32.mxu0 %v1741
        %1855 = vmatmul.mubr.f32.gmra.mxu0 %v1740
        %v1856 = vpop.f32.mrf.mxu0
        %v1857 = vadd.f32 0.0, %v1856
        %v1858 = vpop.f32.mrf.mxu0
        %1859 = vmatprep.mubr.f32.mxu0 %v1743
        %1860 = vmatmul.mubr.f32.gmra.mxu0 %v1742
        %v1861 = vpop.f32.mrf.mxu0
        %v1862 = vadd.f32 0.0, %v1861
        %v1863 = vpop.f32.mrf.mxu0
        %1864 = vmatprep.mubr.f32.mxu0 %v1745
        %1865 = vmatmul.mubr.f32.gmra.mxu0 %v1744
        %v1866 = vpop.f32.mrf.mxu0
        %v1867 = vadd.f32 0.0, %v1866
        %v1868 = vpop.f32.mrf.mxu0
        %1869 = vmatprep.mubr.f32.mxu0 %v1747
        %1870 = vmatmul.mubr.f32.gmra.mxu0 %v1746
        %v1871 = vpop.f32.mrf.mxu0
        %v1872 = vadd.f32 0.0, %v1871
        %v1873 = vpop.f32.mrf.mxu0
        %1874 = vmatprep.mubr.f32.mxu0 %v1749
        %1875 = vmatmul.mubr.f32.gmra.mxu0 %v1748
        %v1876 = vpop.f32.mrf.mxu0
        %v1877 = vadd.f32 0.0, %v1876
        %v1878 = vpop.f32.mrf.mxu0
        %1879 = vmatprep.mubr.f32.mxu0 %v1751
        %1880 = vmatmul.mubr.f32.gmra.mxu0 %v1750
        %v1881 = vpop.f32.mrf.mxu0
        %v1882 = vadd.f32 0.0, %v1881
        %v1883 = vpop.f32.mrf.mxu0
        %1884 = vmatprep.mubr.f32.mxu0 %v1753
        %1885 = vmatmul.mubr.f32.gmra.mxu0 %v1752
        %v1886 = vpop.f32.mrf.mxu0
        %v1887 = vadd.f32 0.0, %v1886
        %v1888 = vpop.f32.mrf.mxu0
        %1889 = vmatprep.mubr.f32.mxu0 %v1755
        %1890 = vmatmul.mubr.f32.gmra.mxu0 %v1754
        %v1891 = vpop.f32.mrf.mxu0
        %v1892 = vadd.f32 0.0, %v1891
        %v1893 = vpop.f32.mrf.mxu0
        %1894 = vmatprep.mubr.f32.mxu0 %v1757
        %1895 = vmatmul.mubr.f32.gmra.mxu0 %v1756
        %v1896 = vpop.f32.mrf.mxu0
        %v1897 = vadd.f32 0.0, %v1896
        %v1898 = vpop.f32.mrf.mxu0
        %1899 = vmatprep.mubr.f32.mxu0 %v1759
        %1900 = vmatmul.mubr.f32.gmra.mxu0 %v1758
        %v1901 = vpop.f32.mrf.mxu0
        %v1902 = vadd.f32 0.0, %v1901
        %v1903 = vpop.f32.mrf.mxu0
        %1904 = vdwg.mxu0
        %v1905 = vld [vmem:[%s4] sm:$0xff]
        %v1906 = vld [vmem:[%s4 + $0x8] sm:$0xff]
        %v1907 = vld [vmem:[%s4 + $0x10] sm:$0xff]
        %v1908 = vld [vmem:[%s4 + $0x18] sm:$0xff]
        %v1909 = vld [vmem:[%s4 + $0x20] sm:$0xff]
        %v1910 = vld [vmem:[%s4 + $0x28] sm:$0xff]
        %v1911 = vld [vmem:[%s4 + $0x30] sm:$0xff]
        %v1912 = vld [vmem:[%s4 + $0x38] sm:$0xff]
        %v1913 = vld [vmem:[%s4 + $0x40] sm:$0xff]
        %v1914 = vld [vmem:[%s4 + $0x48] sm:$0xff]
        %v1915 = vld [vmem:[%s4 + $0x50] sm:$0xff]
        %v1916 = vld [vmem:[%s4 + $0x58] sm:$0xff]
        %v1917 = vld [vmem:[%s4 + $0x60] sm:$0xff]
        %v1918 = vld [vmem:[%s4 + $0x68] sm:$0xff]
        %v1919 = vld [vmem:[%s4 + $0x70] sm:$0xff]
        %v1920 = vld [vmem:[%s4 + $0x78] sm:$0xff]
        %v1921 = vld [vmem:[%s6] sm:$0xff]
        %v1922 = vld [vmem:[%s6 + $0x8] sm:$0xff]
        %v1923 = vld [vmem:[%s6 + $0x10] sm:$0xff]
        %v1924 = vld [vmem:[%s6 + $0x18] sm:$0xff]
        %v1925 = vld [vmem:[%s6 + $0x20] sm:$0xff]
        %v1926 = vld [vmem:[%s6 + $0x28] sm:$0xff]
        %v1927 = vld [vmem:[%s6 + $0x30] sm:$0xff]
        %v1928 = vld [vmem:[%s6 + $0x38] sm:$0xff]
        %v1929 = vld [vmem:[%s6 + $0x40] sm:$0xff]
        %v1930 = vld [vmem:[%s6 + $0x48] sm:$0xff]
        %v1931 = vld [vmem:[%s6 + $0x50] sm:$0xff]
        %v1932 = vld [vmem:[%s6 + $0x58] sm:$0xff]
        %v1933 = vld [vmem:[%s6 + $0x60] sm:$0xff]
        %v1934 = vld [vmem:[%s6 + $0x68] sm:$0xff]
        %v1935 = vld [vmem:[%s6 + $0x70] sm:$0xff]
        %v1936 = vld [vmem:[%s6 + $0x78] sm:$0xff]
        %1938 = vset.pattern.permute.xlu0 2
        %1939 = vperm.xlu0 %1938, %v1921
        %v1940 = vpop.permute.xlu0 %1939
        %1943 = vset.pattern.permute.xlu0 2
        %1944 = vperm.xlu0 %1943, %v1922
        %v1945 = vpop.permute.xlu0 %1944
        %1948 = vset.pattern.permute.xlu0 2
        %1949 = vperm.xlu0 %1948, %v1923
        %v1950 = vpop.permute.xlu0 %1949
        %1953 = vset.pattern.permute.xlu0 2
        %1954 = vperm.xlu0 %1953, %v1924
        %v1955 = vpop.permute.xlu0 %1954
        %1958 = vset.pattern.permute.xlu0 2
        %1959 = vperm.xlu0 %1958, %v1925
        %v1960 = vpop.permute.xlu0 %1959
        %1963 = vset.pattern.permute.xlu0 2
        %1964 = vperm.xlu0 %1963, %v1926
        %v1965 = vpop.permute.xlu0 %1964
        %1968 = vset.pattern.permute.xlu0 2
        %1969 = vperm.xlu0 %1968, %v1927
        %v1970 = vpop.permute.xlu0 %1969
        %1973 = vset.pattern.permute.xlu0 2
        %1974 = vperm.xlu0 %1973, %v1928
        %v1975 = vpop.permute.xlu0 %1974
        %1978 = vset.pattern.permute.xlu0 2
        %1979 = vperm.xlu0 %1978, %v1929
        %v1980 = vpop.permute.xlu0 %1979
        %1983 = vset.pattern.permute.xlu0 2
        %1984 = vperm.xlu0 %1983, %v1930
        %v1985 = vpop.permute.xlu0 %1984
        %1988 = vset.pattern.permute.xlu0 2
        %1989 = vperm.xlu0 %1988, %v1931
        %v1990 = vpop.permute.xlu0 %1989
        %1993 = vset.pattern.permute.xlu0 2
        %1994 = vperm.xlu0 %1993, %v1932
        %v1995 = vpop.permute.xlu0 %1994
        %1998 = vset.pattern.permute.xlu0 2
        %1999 = vperm.xlu0 %1998, %v1933
        %v2000 = vpop.permute.xlu0 %1999
        %2003 = vset.pattern.permute.xlu0 2
        %2004 = vperm.xlu0 %2003, %v1934
        %v2005 = vpop.permute.xlu0 %2004
        %2008 = vset.pattern.permute.xlu0 2
        %2009 = vperm.xlu0 %2008, %v1935
        %v2010 = vpop.permute.xlu0 %2009
        %2013 = vset.pattern.permute.xlu0 2
        %2014 = vperm.xlu0 %2013, %v1936
        %v2015 = vpop.permute.xlu0 %2014
        %2017 = vmatprep.subr.mxu0 0.0
        %2018 = vmatpush1.msra.mxu0 %v1902
        %2019 = vmatprep.subr.mxu0 0.0
        %2020 = vmatpush1.msra.mxu0 %v1897
        %2021 = vmatprep.subr.mxu0 0.0
        %2022 = vmatpush1.msra.mxu0 %v1892
        %2023 = vmatprep.subr.mxu0 0.0
        %2024 = vmatpush1.msra.mxu0 %v1887
        %2025 = vmatprep.subr.mxu0 0.0
        %2026 = vmatpush1.msra.mxu0 %v1882
        %2027 = vmatprep.subr.mxu0 0.0
        %2028 = vmatpush1.msra.mxu0 %v1877
        %2029 = vmatprep.subr.mxu0 0.0
        %2030 = vmatpush1.msra.mxu0 %v1872
        %2031 = vmatprep.subr.mxu0 0.0
        %2032 = vmatpush1.msra.mxu0 %v1867
        %2033 = vmatprep.subr.mxu0 0.0
        %2034 = vmatpush1.msra.mxu0 %v1862
        %2035 = vmatprep.subr.mxu0 0.0
        %2036 = vmatpush1.msra.mxu0 %v1857
        %2037 = vmatprep.subr.mxu0 0.0
        %2038 = vmatpush1.msra.mxu0 %v1852
        %2039 = vmatprep.subr.mxu0 0.0
        %2040 = vmatpush1.msra.mxu0 %v1847
        %2041 = vmatprep.subr.mxu0 0.0
        %2042 = vmatpush1.msra.mxu0 %v1842
        %2043 = vmatprep.subr.mxu0 0.0
        %2044 = vmatpush1.msra.mxu0 %v1837
        %2045 = vmatprep.subr.mxu0 0.0
        %2046 = vmatpush1.msra.mxu0 %v1832
        %2047 = vmatprep.subr.mxu0 0.0
        %2048 = vmatpush1.msra.mxu0 %v1827
        %2049 = vmatprep.subr.mxu0 0.0
        %2050 = vmatpush2.msra.mxu0 0.0
        %2051 = vmatprep.subr.mxu0 0.0
        %2052 = vmatpush2.msra.mxu0 0.0
        %2053 = vmatprep.subr.mxu0 0.0
        %2054 = vmatpush2.msra.mxu0 0.0
        %2055 = vmatprep.subr.mxu0 0.0
        %2056 = vmatpush2.msra.mxu0 0.0
        %2057 = vmatprep.subr.mxu0 0.0
        %2058 = vmatpush2.msra.mxu0 0.0
        %2059 = vmatprep.subr.mxu0 0.0
        %2060 = vmatpush2.msra.mxu0 0.0
        %2061 = vmatprep.subr.mxu0 0.0
        %2062 = vmatpush2.msra.mxu0 0.0
        %2063 = vmatprep.subr.mxu0 0.0
        %2064 = vmatpush2.msra.mxu0 0.0
        %2065 = vmatprep.subr.mxu0 0.0
        %2066 = vmatpush2.msra.mxu0 0.0
        %2067 = vmatprep.subr.mxu0 0.0
        %2068 = vmatpush2.msra.mxu0 0.0
        %2069 = vmatprep.subr.mxu0 0.0
        %2070 = vmatpush2.msra.mxu0 0.0
        %2071 = vmatprep.subr.mxu0 0.0
        %2072 = vmatpush2.msra.mxu0 0.0
        %2073 = vmatprep.subr.mxu0 0.0
        %2074 = vmatpush2.msra.mxu0 0.0
        %2075 = vmatprep.subr.mxu0 0.0
        %2076 = vmatpush2.msra.mxu0 0.0
        %2077 = vmatprep.subr.mxu0 0.0
        %2078 = vmatpush2.msra.mxu0 0.0
        %2079 = vmatprep.subr.mxu0 0.0
        %2080 = vmatpush2.msra.mxu0 0.0
        %2081 = vmatprep.mubr.f32.mxu0 0.0
        %2082 = vmatmul.mubr.f32.gmra.mxu0 %v1905
        %v2083 = vpop.f32.mrf.mxu0
        %v2084 = vadd.f32 %v1940, %v2083
        %v2085 = vpop.f32.mrf.mxu0
        %2086 = vmatprep.mubr.f32.mxu0 0.0
        %2087 = vmatmul.mubr.f32.gmra.mxu0 %v1906
        %v2088 = vpop.f32.mrf.mxu0
        %v2089 = vadd.f32 %v1945, %v2088
        %v2090 = vpop.f32.mrf.mxu0
        %2091 = vmatprep.mubr.f32.mxu0 0.0
        %2092 = vmatmul.mubr.f32.gmra.mxu0 %v1907
        %v2093 = vpop.f32.mrf.mxu0
        %v2094 = vadd.f32 %v1950, %v2093
        %v2095 = vpop.f32.mrf.mxu0
        %2096 = vmatprep.mubr.f32.mxu0 0.0
        %2097 = vmatmul.mubr.f32.gmra.mxu0 %v1908
        %v2098 = vpop.f32.mrf.mxu0
        %v2099 = vadd.f32 %v1955, %v2098
        %v2100 = vpop.f32.mrf.mxu0
        %2101 = vmatprep.mubr.f32.mxu0 0.0
        %2102 = vmatmul.mubr.f32.gmra.mxu0 %v1909
        %v2103 = vpop.f32.mrf.mxu0
        %v2104 = vadd.f32 %v1960, %v2103
        %v2105 = vpop.f32.mrf.mxu0
        %2106 = vmatprep.mubr.f32.mxu0 0.0
        %2107 = vmatmul.mubr.f32.gmra.mxu0 %v1910
        %v2108 = vpop.f32.mrf.mxu0
        %v2109 = vadd.f32 %v1965, %v2108
        %v2110 = vpop.f32.mrf.mxu0
        %2111 = vmatprep.mubr.f32.mxu0 0.0
        %2112 = vmatmul.mubr.f32.gmra.mxu0 %v1911
        %v2113 = vpop.f32.mrf.mxu0
        %v2114 = vadd.f32 %v1970, %v2113
        %v2115 = vpop.f32.mrf.mxu0
        %2116 = vmatprep.mubr.f32.mxu0 0.0
        %2117 = vmatmul.mubr.f32.gmra.mxu0 %v1912
        %v2118 = vpop.f32.mrf.mxu0
        %v2119 = vadd.f32 %v1975, %v2118
        %v2120 = vpop.f32.mrf.mxu0
        %2121 = vmatprep.mubr.f32.mxu0 0.0
        %2122 = vmatmul.mubr.f32.gmra.mxu0 %v1913
        %v2123 = vpop.f32.mrf.mxu0
        %v2124 = vadd.f32 %v1980, %v2123
        %v2125 = vpop.f32.mrf.mxu0
        %2126 = vmatprep.mubr.f32.mxu0 0.0
        %2127 = vmatmul.mubr.f32.gmra.mxu0 %v1914
        %v2128 = vpop.f32.mrf.mxu0
        %v2129 = vadd.f32 %v1985, %v2128
        %v2130 = vpop.f32.mrf.mxu0
        %2131 = vmatprep.mubr.f32.mxu0 0.0
        %2132 = vmatmul.mubr.f32.gmra.mxu0 %v1915
        %v2133 = vpop.f32.mrf.mxu0
        %v2134 = vadd.f32 %v1990, %v2133
        %v2135 = vpop.f32.mrf.mxu0
        %2136 = vmatprep.mubr.f32.mxu0 0.0
        %2137 = vmatmul.mubr.f32.gmra.mxu0 %v1916
        %v2138 = vpop.f32.mrf.mxu0
        %v2139 = vadd.f32 %v1995, %v2138
        %v2140 = vpop.f32.mrf.mxu0
        %2141 = vmatprep.mubr.f32.mxu0 0.0
        %2142 = vmatmul.mubr.f32.gmra.mxu0 %v1917
        %v2143 = vpop.f32.mrf.mxu0
        %v2144 = vadd.f32 %v2000, %v2143
        %v2145 = vpop.f32.mrf.mxu0
        %2146 = vmatprep.mubr.f32.mxu0 0.0
        %2147 = vmatmul.mubr.f32.gmra.mxu0 %v1918
        %v2148 = vpop.f32.mrf.mxu0
        %v2149 = vadd.f32 %v2005, %v2148
        %v2150 = vpop.f32.mrf.mxu0
        %2151 = vmatprep.mubr.f32.mxu0 0.0
        %2152 = vmatmul.mubr.f32.gmra.mxu0 %v1919
        %v2153 = vpop.f32.mrf.mxu0
        %v2154 = vadd.f32 %v2010, %v2153
        %v2155 = vpop.f32.mrf.mxu0
        %2156 = vmatprep.mubr.f32.mxu0 0.0
        %2157 = vmatmul.mubr.f32.gmra.mxu0 %v1920
        %v2158 = vpop.f32.mrf.mxu0
        %v2159 = vadd.f32 %v2015, %v2158
        %v2160 = vpop.f32.mrf.mxu0
        %2161 = vdwg.mxu0
        %s2162 = sshra.s32 %s1277, 7
        %s2163 = sand.u32 %s1277, 127
        %s2164 = smul.addr %s2162, 8
        %s2165 = scalar_lea.vmem %s286, %s2164
        %v2166 = vld [vmem:[%s2165] sm:$0xff]
        %v2167 = vld [vmem:[%s2165 + $0x10] sm:$0xff]
        %v2168 = vld [vmem:[%s2165 + $0x20] sm:$0xff]
        %v2169 = vld [vmem:[%s2165 + $0x30] sm:$0xff]
        %v2170 = vld [vmem:[%s2165 + $0x40] sm:$0xff]
        %v2171 = vld [vmem:[%s2165 + $0x50] sm:$0xff]
        %v2172 = vld [vmem:[%s2165 + $0x60] sm:$0xff]
        %v2173 = vld [vmem:[%s2165 + $0x70] sm:$0xff]
        %v2174 = vld [vmem:[%s2165 + $0x80] sm:$0xff]
        %v2175 = vld [vmem:[%s2165 + $0x90] sm:$0xff]
        %v2176 = vld [vmem:[%s2165 + $0xa0] sm:$0xff]
        %v2177 = vld [vmem:[%s2165 + $0xb0] sm:$0xff]
        %v2178 = vld [vmem:[%s2165 + $0xc0] sm:$0xff]
        %v2179 = vld [vmem:[%s2165 + $0xd0] sm:$0xff]
        %v2180 = vld [vmem:[%s2165 + $0xe0] sm:$0xff]
        %v2181 = vld [vmem:[%s2165 + $0xf0] sm:$0xff]
        %v2182 = vadd.f32 %v2084, %v2166
        %v2183 = vadd.f32 %v2089, %v2167
        %v2184 = vadd.f32 %v2094, %v2168
        %v2185 = vadd.f32 %v2099, %v2169
        %v2186 = vadd.f32 %v2104, %v2170
        %v2187 = vadd.f32 %v2109, %v2171
        %v2188 = vadd.f32 %v2114, %v2172
        %v2189 = vadd.f32 %v2119, %v2173
        %v2190 = vadd.f32 %v2124, %v2174
        %v2191 = vadd.f32 %v2129, %v2175
        %v2192 = vadd.f32 %v2134, %v2176
        %v2193 = vadd.f32 %v2139, %v2177
        %v2194 = vadd.f32 %v2144, %v2178
        %v2195 = vadd.f32 %v2149, %v2179
        %v2196 = vadd.f32 %v2154, %v2180
        %v2197 = vadd.f32 %v2159, %v2181
        %2198 = vst [vmem:[%s281] sm:$0xff] %v2182
        %2199 = vst [vmem:[%s281 + $0x8] sm:$0xff] %v2183
        %2200 = vst [vmem:[%s281 + $0x10] sm:$0xff] %v2184
        %2201 = vst [vmem:[%s281 + $0x18] sm:$0xff] %v2185
        %2202 = vst [vmem:[%s281 + $0x20] sm:$0xff] %v2186
        %2203 = vst [vmem:[%s281 + $0x28] sm:$0xff] %v2187
        %2204 = vst [vmem:[%s281 + $0x30] sm:$0xff] %v2188
        %2205 = vst [vmem:[%s281 + $0x38] sm:$0xff] %v2189
        %2206 = vst [vmem:[%s281 + $0x40] sm:$0xff] %v2190
        %2207 = vst [vmem:[%s281 + $0x48] sm:$0xff] %v2191
        %2208 = vst [vmem:[%s281 + $0x50] sm:$0xff] %v2192
        %2209 = vst [vmem:[%s281 + $0x58] sm:$0xff] %v2193
        %2210 = vst [vmem:[%s281 + $0x60] sm:$0xff] %v2194
        %2211 = vst [vmem:[%s281 + $0x68] sm:$0xff] %v2195
        %2212 = vst [vmem:[%s281 + $0x70] sm:$0xff] %v2196
        %2213 = vst [vmem:[%s281 + $0x78] sm:$0xff] %v2197
        %s2214 = sand.u32 %s192, 1
        %s2215 = sand.u32 %s192, 1
        %s2216 = smul.addr %s2215, 128
        %s2217 = scalar_lea.vmem [#allocation5], %s2216
        // Predicated region
        $region53: #{_attention_block.1} parent=47 // pred_check
          %p2218 = pneg %p202
        $region54: #{_attention_block.1} parent=47 // pred_check_branch
          %2220 = sbr.rel (%p2218) target = $region56
        $region55: #{_attention_block.1} parent=47 // pred_region
          %s2221 = smul.addr %s22, 32
          %s2222 = sadd.s32 %s23, %s2221
          %s2223 = smul.addr %s2222, 8
          %s2224 = scalar_lea.vmem %s7, %s2223
          // Predicated region
          $region57: #{_attention_block.1} parent=55 // pred_check
            _
          $region58: #{_attention_block.1} parent=55 // pred_check_branch
            %2226 = sbr.rel (0) target = $region60
          $region59: #{_attention_block.1} parent=55 // pred_region
            // Predicated region
            $region61: #{_attention_block.1} parent=59 // pred_check
              _
            $region62: #{_attention_block.1} parent=59 // pred_check_branch
              %2228 = sbr.rel (0) target = $region64
            $region63: #{_attention_block.1} parent=59 // pred_region
              // Predicated region
              $region76: #{_attention_block.1} parent=63 // pred_check
                _
              $region77: #{_attention_block.1} parent=63 // pred_check_branch
                %2274 = sbr.rel (0) target = $region79
              $region78: #{_attention_block.1} parent=63 // pred_region
                loop: start=0, step=1, limit=1
                $region80: #{_attention_block.1} parent=78 // loop_pre_header
                  _
                $region81: #{_attention_block.1} parent=78 // loop_header
                  %s2276 = sphi 0, %s2280
                  %p2277 = scmp.ge.s32.totalorder %s2276, 1
                  %s2281 = sphi %s2217, %s2217
                  %s2282 = sphi %s2224, %s2224
                $region82: #{_attention_block.1} parent=78 // loop_header_branch
                  %2279 = sbr.rel (%p2277) target = $region86
                $region83: #{_attention_block.1} parent=78 // loop_body
                  %v2283 = vld [vmem:[%s2281] sm:$0xff]
                  %2284 = vst [vmem:[%s2282] sm:$0xff] %v2283
                  %v2285 = vld [vmem:[%s2281 + $0x8] sm:$0xff]
                  %2286 = vst [vmem:[%s2282 + $0x10] sm:$0xff] %v2285
                  %v2287 = vld [vmem:[%s2281 + $0x10] sm:$0xff]
                  %2288 = vst [vmem:[%s2282 + $0x20] sm:$0xff] %v2287
                  %v2289 = vld [vmem:[%s2281 + $0x18] sm:$0xff]
                  %2290 = vst [vmem:[%s2282 + $0x30] sm:$0xff] %v2289
                  %v2291 = vld [vmem:[%s2281 + $0x20] sm:$0xff]
                  %2292 = vst [vmem:[%s2282 + $0x40] sm:$0xff] %v2291
                  %v2293 = vld [vmem:[%s2281 + $0x28] sm:$0xff]
                  %2294 = vst [vmem:[%s2282 + $0x50] sm:$0xff] %v2293
                  %v2295 = vld [vmem:[%s2281 + $0x30] sm:$0xff]
                  %2296 = vst [vmem:[%s2282 + $0x60] sm:$0xff] %v2295
                  %v2297 = vld [vmem:[%s2281 + $0x38] sm:$0xff]
                  %2298 = vst [vmem:[%s2282 + $0x70] sm:$0xff] %v2297
                  %v2299 = vld [vmem:[%s2281 + $0x40] sm:$0xff]
                  %2300 = vst [vmem:[%s2282 + $0x80] sm:$0xff] %v2299
                  %v2301 = vld [vmem:[%s2281 + $0x48] sm:$0xff]
                  %2302 = vst [vmem:[%s2282 + $0x90] sm:$0xff] %v2301
                  %v2303 = vld [vmem:[%s2281 + $0x50] sm:$0xff]
                  %2304 = vst [vmem:[%s2282 + $0xa0] sm:$0xff] %v2303
                  %v2305 = vld [vmem:[%s2281 + $0x58] sm:$0xff]
                  %2306 = vst [vmem:[%s2282 + $0xb0] sm:$0xff] %v2305
                  %v2307 = vld [vmem:[%s2281 + $0x60] sm:$0xff]
                  %2308 = vst [vmem:[%s2282 + $0xc0] sm:$0xff] %v2307
                  %v2309 = vld [vmem:[%s2281 + $0x68] sm:$0xff]
                  %2310 = vst [vmem:[%s2282 + $0xd0] sm:$0xff] %v2309
                  %v2311 = vld [vmem:[%s2281 + $0x70] sm:$0xff]
                  %2312 = vst [vmem:[%s2282 + $0xe0] sm:$0xff] %v2311
                  %v2313 = vld [vmem:[%s2281 + $0x78] sm:$0xff]
                  %2314 = vst [vmem:[%s2282 + $0xf0] sm:$0xff] %v2313
                $region84: #{_attention_block.1} parent=78 // loop_footer
                  %s2280 = sadd.s32 1, %s2276
                $region85: #{_attention_block.1} parent=78 // loop_footer_branch
                  %2275 = sbr.rel target = $region81
                $region86: #{_attention_block.1} parent=78 // loop_exit
                  _
              $region79: #{_attention_block.1} parent=63 // pred_fallthru
                _
              // Predicated region
              $region87: #{_attention_block.1} parent=63 // pred_check
                _
              $region88: #{_attention_block.1} parent=63 // pred_check_branch
                %2316 = sbr.rel target = $region90
              $region89: #{_attention_block.1} parent=63 // pred_region
                _
              $region90: #{_attention_block.1} parent=63 // pred_fallthru
                _
            $region64: #{_attention_block.1} parent=59 // pred_fallthru
              _
            // Predicated region
            $region65: #{_attention_block.1} parent=59 // pred_check
              _
            $region66: #{_attention_block.1} parent=59 // pred_check_branch
              %2230 = sbr.rel target = $region68
            $region67: #{_attention_block.1} parent=59 // pred_region
              %s2232 = ssub.s32 256, 1
              loop: start=0, step=1, limit=1
              $region69: #{_attention_block.1} parent=67 // loop_pre_header
                _
              $region70: #{_attention_block.1} parent=67 // loop_header
                %s2234 = sphi 0, %s2238
                %p2235 = scmp.ge.s32.totalorder %s2234, 1
                %s2239 = sphi %s2217, %s2217
                %s2240 = sphi %s2224, %s2224
              $region71: #{_attention_block.1} parent=67 // loop_header_branch
                %2237 = sbr.rel (%p2235) target = $region75
              $region72: #{_attention_block.1} parent=67 // loop_body
                %v2241 = vld [vmem:[%s2239] sm:%s2232]
                %2242 = vst [vmem:[%s2240] sm:%s2232] %v2241
                %v2243 = vld [vmem:[%s2239 + $0x8] sm:%s2232]
                %2244 = vst [vmem:[%s2240 + $0x10] sm:%s2232] %v2243
                %v2245 = vld [vmem:[%s2239 + $0x10] sm:%s2232]
                %2246 = vst [vmem:[%s2240 + $0x20] sm:%s2232] %v2245
                %v2247 = vld [vmem:[%s2239 + $0x18] sm:%s2232]
                %2248 = vst [vmem:[%s2240 + $0x30] sm:%s2232] %v2247
                %v2249 = vld [vmem:[%s2239 + $0x20] sm:%s2232]
                %2250 = vst [vmem:[%s2240 + $0x40] sm:%s2232] %v2249
                %v2251 = vld [vmem:[%s2239 + $0x28] sm:%s2232]
                %2252 = vst [vmem:[%s2240 + $0x50] sm:%s2232] %v2251
                %v2253 = vld [vmem:[%s2239 + $0x30] sm:%s2232]
                %2254 = vst [vmem:[%s2240 + $0x60] sm:%s2232] %v2253
                %v2255 = vld [vmem:[%s2239 + $0x38] sm:%s2232]
                %2256 = vst [vmem:[%s2240 + $0x70] sm:%s2232] %v2255
                %v2257 = vld [vmem:[%s2239 + $0x40] sm:%s2232]
                %2258 = vst [vmem:[%s2240 + $0x80] sm:%s2232] %v2257
                %v2259 = vld [vmem:[%s2239 + $0x48] sm:%s2232]
                %2260 = vst [vmem:[%s2240 + $0x90] sm:%s2232] %v2259
                %v2261 = vld [vmem:[%s2239 + $0x50] sm:%s2232]
                %2262 = vst [vmem:[%s2240 + $0xa0] sm:%s2232] %v2261
                %v2263 = vld [vmem:[%s2239 + $0x58] sm:%s2232]
                %2264 = vst [vmem:[%s2240 + $0xb0] sm:%s2232] %v2263
                %v2265 = vld [vmem:[%s2239 + $0x60] sm:%s2232]
                %2266 = vst [vmem:[%s2240 + $0xc0] sm:%s2232] %v2265
                %v2267 = vld [vmem:[%s2239 + $0x68] sm:%s2232]
                %2268 = vst [vmem:[%s2240 + $0xd0] sm:%s2232] %v2267
                %v2269 = vld [vmem:[%s2239 + $0x70] sm:%s2232]
                %2270 = vst [vmem:[%s2240 + $0xe0] sm:%s2232] %v2269
                %v2271 = vld [vmem:[%s2239 + $0x78] sm:%s2232]
                %2272 = vst [vmem:[%s2240 + $0xf0] sm:%s2232] %v2271
              $region73: #{_attention_block.1} parent=67 // loop_footer
                %s2238 = sadd.s32 1, %s2234
              $region74: #{_attention_block.1} parent=67 // loop_footer_branch
                %2233 = sbr.rel target = $region70
              $region75: #{_attention_block.1} parent=67 // loop_exit
                _
            $region68: #{_attention_block.1} parent=59 // pred_fallthru
              _
          $region60: #{_attention_block.1} parent=55 // pred_fallthru
            _
          %2317 = vnop
        $region56: #{_attention_block.1} parent=47 // pred_fallthru
          _
      $region48: #{_attention_block.1} parent=5 // pred_fallthru
        _
      %p2318 = scmp.le.s32.totalorder 2, %s13
      // Predicated region
      $region91: #{_attention_block.1} parent=5 // pred_check
        %p2319 = pneg %p2318
      $region92: #{_attention_block.1} parent=5 // pred_check_branch
        %2321 = sbr.rel (%p2319) target = $region94
      $region93: #{_attention_block.1} parent=5 // pred_region
        %s2322 = ssub.s32 %s13, 2
        // Predicated region
        $region95: #{_attention_block.1} parent=93 // pred_check
          %p2323 = pneg %p208
        $region96: #{_attention_block.1} parent=93 // pred_check_branch
          %2325 = sbr.rel (%p2323) target = $region98
        $region97: #{_attention_block.1} parent=93 // pred_region
          %s2326 = sand.u32 %s193, 1
          %s2327 = sand.u32 %s193, 1
          %s2328 = smul.addr %s2327, 128
          %s2329 = scalar_lea.vmem [#allocation5], %s2328
        $region98: #{_attention_block.1} parent=93 // pred_fallthru
          _
      $region94: #{_attention_block.1} parent=5 // pred_fallthru
        _
    $region6: #{_attention_block.1} parent=1 // loop_footer
      %s17 = sadd.s32 1, %s13
    $region7: #{_attention_block.1} parent=1 // loop_footer_branch
      %12 = sbr.rel target = $region3
    $region8: #{_attention_block.1} parent=1 // loop_exit
      _

</llo_original>
